<compile_context>
chip_gen: v6e
topology: v6e:2x2x1
jax: 0.10.0
libtpu: 0.0.40
codegen_flags: <defaults>
</compile_context>

<pallas_src>
import jax
import jax.numpy as jnp
from jax.experimental import pallas as pl
from jax.experimental.pallas import tpu as pltpu

HOP_ALPHA = 0.05   # hopalpha of the ST-GCN mixprop layers


# ----------------------------- Pallas kernel ------------------------------ #
def astmad_kernel(x_ref, a_ref, wee_ref, woe_ref, wgdl_ref, wgdh_ref,
                  wed_ref, wft_ref, bias_ref, o_ref):
    f32, bf16 = jnp.float32, jnp.bfloat16
    n = a_ref.shape[0]                 # (padded) number of graph nodes
    r = x_ref.shape[0]                 # rows in this grid step = g * n
    g = r // n                         # number of (batch, time) groups
    c16 = wee_ref.shape[0]             # 16
    c64 = woe_ref.shape[1]             # 64

    bias = bias_ref[...]               # [8, 64] packed f32 constants
    v1 = bias[0:1, :c16]
    v2 = bias[1:2, :c16]
    b_enc = bias[2:3, :c16]
    b_ee = bias[3:4, :wee_ref.shape[1]]
    b_oe = bias[4:5, :c64]
    b_gd = bias[5:6, :c64]
    b_ed = bias[6:7, :wed_ref.shape[1]]
    b_fo = bias[7:8, 0:1]

    # A is tiny ([N, N] bf16); broadcast per (batch,time) group of this step so
    # both graph hops are plain batched MXU matmuls (bounded by the grid chunk).
    a_blk = jnp.broadcast_to(a_ref[...], (g, n, n))

    # Encoder graph hop on the raw 1-channel signal (conv_start folded away).
    x_col = x_ref[...]                                          # [r, 1] f32
    x3 = x_col.astype(bf16).reshape(g, n, 1)                    # leading split
    ax = jnp.einsum('gvw,gwc->gvc', a_blk, x3,
                    preferred_element_type=f32).reshape(r, 1)

    # conv_start (1->16) + encoder mixprop MLP (gcn_depth=1), folded.
    h = jax.nn.relu(x_col * v1 + ax * v2 + b_enc)               # [r, 16]

    # encoder end conv (16->32) + relu, output conv (32->64) -> latent z
    h = jax.nn.relu(jnp.dot(h.astype(bf16), wee_ref[...],
                            preferred_element_type=f32) + b_ee)  # [r, 32]
    z = jnp.dot(h.astype(bf16), woe_ref[...],
                preferred_element_type=f32) + b_oe               # [r, 64]

    # decoder mixprop: graph hop over nodes on 64 channels (dominant matmul)
    z_bf = z.astype(bf16)
    az = jnp.einsum('gvw,gwc->gvc', a_blk, z_bf.reshape(g, n, c64),
                    preferred_element_type=f32).reshape(r, c64)
    z1 = HOP_ALPHA * z + (1.0 - HOP_ALPHA) * az
    h = jax.nn.relu(
        jnp.dot(z_bf, wgdl_ref[...], preferred_element_type=f32)
        + jnp.dot(z1.astype(bf16), wgdh_ref[...], preferred_element_type=f32)
        + b_gd)                                                  # [r, 64]

    # decoder end conv (64->32) + relu
    h = jax.nn.relu(jnp.dot(h.astype(bf16), wed_ref[...],
                            preferred_element_type=f32) + b_ed)  # [r, 32]

    # folded (decoder output conv 32->16) @ (conv_end 16->1), emitted in
    # transposed form -> lane-dense [1, r] store.
    h_t = h.T.astype(bf16)                                       # [32, r]
    o_ref[...] = jnp.dot(wft_ref[...], h_t,
                         preferred_element_type=f32) + b_fo      # [1, r]


# ------------------------------ JAX wrapper -------------------------------- #
def _round_up(x, m):
    return (x + m - 1) // m * m


def _groups_per_step(num_groups, n_pad, target_rows=512):
    """Smallest divisor of num_groups giving >= target rows per grid step and a
    128-lane-aligned output block; falls back to a single step."""
    for gc in range(1, num_groups + 1):
        if num_groups % gc:
            continue
        rows = gc * n_pad
        if rows >= target_rows and rows % 128 == 0:
            return gc
    return num_groups


def _fold_params(params):
    """Offline weight folds: conv_start+encoder-mixprop and dec-out+conv_end."""
    a = HOP_ALPHA
    ws, bs = params['w_start'], params['b_start']               # [1,16],[1,16]
    wg, bg = params['w_gcn_e'], params['b_gcn_e']               # [32,16],[1,16]
    c_node = ws.shape[1]
    wg_lo, wg_hi = wg[:c_node], wg[c_node:]
    v1 = ws @ (wg_lo + a * wg_hi)                               # [1,16]
    v2 = (1.0 - a) * (ws @ wg_hi)                               # [1,16]
    b_enc = bs @ (wg_lo + wg_hi) + bg                           # [1,16]

    w_fold = params['w_out_d'] @ params['w_cend']               # [32,1]
    b_fold = params['b_out_d'] @ params['w_cend'] + params['b_cend']  # [1,1]

    c_lat = params['w_out_e'].shape[1]
    wgd = params['w_gcn_d']
    return dict(
        v1=v1, v2=v2, b_enc=b_enc,
        wee=params['w_end_e'], bee=params['b_end_e'],
        woe=params['w_out_e'], boe=params['b_out_e'],
        wgd_lo=wgd[:c_lat], wgd_hi=wgd[c_lat:], bgd=params['b_gcn_d'],
        wed=params['w_end_d'], bed=params['b_end_d'],
        wft=w_fold.T, bfo=b_fold)


def astmad_forward(x, params, A_norm):
    """x: [B, T, N] float32 -> reconstruction [B, T, N] (matches torch module)."""
    B, T, N = x.shape
    n_pad = _round_up(N, 8)            # keep node-axis reshapes layout no-ops
    G = B * T
    R = G * n_pad
    bf16 = jnp.bfloat16

    f = _fold_params(params)

    # node padding (padded nodes carry zeros and are sliced off at the end)
    x_p = jnp.pad(x.astype(jnp.float32), ((0, 0), (0, 0), (0, n_pad - N)))
    a_p = jnp.zeros((n_pad, n_pad), jnp.float32).at[:N, :N].set(
        A_norm.astype(jnp.float32))

    x_col = x_p.reshape(R, 1)          # rows ordered (batch, time, node)
    a_bf = a_p.astype(bf16)

    # pack the row-vector constants into one (8, 64) f32 slab
    c64 = f['woe'].shape[1]
    bias_pack = jnp.zeros((8, c64), jnp.float32)
    bias_pack = bias_pack.at[0, :f['v1'].shape[1]].set(f['v1'][0])
    bias_pack = bias_pack.at[1, :f['v2'].shape[1]].set(f['v2'][0])
    bias_pack = bias_pack.at[2, :f['b_enc'].shape[1]].set(f['b_enc'][0])
    bias_pack = bias_pack.at[3, :f['bee'].shape[1]].set(f['bee'][0])
    bias_pack = bias_pack.at[4, :f['boe'].shape[1]].set(f['boe'][0])
    bias_pack = bias_pack.at[5, :f['bgd'].shape[1]].set(f['bgd'][0])
    bias_pack = bias_pack.at[6, :f['bed'].shape[1]].set(f['bed'][0])
    bias_pack = bias_pack.at[7, 0].set(f['bfo'][0, 0])

    weights = [f['wee'], f['woe'], f['wgd_lo'], f['wgd_hi'], f['wed'], f['wft']]
    weights = [w.astype(bf16) for w in weights]     # bf16 MXU operands

    gc = _groups_per_step(G, n_pad)
    rows = gc * n_pad
    grid = (G // gc,)

    def resident(arr):
        nd = arr.ndim
        return pl.BlockSpec(arr.shape, lambda i, _nd=nd: (0,) * _nd)

    in_specs = ([pl.BlockSpec((rows, 1), lambda i: (i, 0)),     # x rows
                 resident(a_bf)]
                + [resident(w) for w in weights]
                + [resident(bias_pack)])

    out = pl.pallas_call(
        astmad_kernel,
        out_shape=jax.ShapeDtypeStruct((1, R), jnp.float32),
        grid=grid,
        in_specs=in_specs,
        out_specs=pl.BlockSpec((1, rows), lambda i: (0, i)),    # lane-dense
        compiler_params=pltpu.CompilerParams(
            dimension_semantics=("parallel",),
            vmem_limit_bytes=32 * 1024 * 1024),
    )(x_col, a_bf, *weights, bias_pack)

    y = out.reshape(B, T, n_pad)[:, :, :N]
    return y


# ----------------------- parameter / graph construction -------------------- #
def init_params(key, num_nodes, emb_dim=16, c_node=16, c_end=32, c_lat=64):
    ks = jax.random.split(key, 22)

    def w(k, shape, scale=0.1):
        return (scale * jax.random.normal(k, shape)).astype(jnp.float32)

    return {
        # EmbeddingGraph (graph learning) parameters
        'emb1': w(ks[0], (num_nodes, emb_dim), 1.0),
        'emb2': w(ks[1], (num_nodes, emb_dim), 1.0),
        'lin1_w': w(ks[2], (emb_dim, emb_dim)),
        'lin1_b': jnp.zeros((emb_dim,), jnp.float32),
        'lin2_w': w(ks[3], (emb_dim, emb_dim)),
        'lin2_b': jnp.zeros((emb_dim,), jnp.float32),
        # conv_start: Conv2d(1, 16, (1,1))
        'w_start': w(ks[4], (1, c_node)),
        'b_start': w(ks[5], (1, c_node), 0.01),
        # encoder: mixprop mlp (concat of 2 hops), end conv, output conv
        'w_gcn_e': w(ks[6], (2 * c_node, c_node)),
        'b_gcn_e': w(ks[7], (1, c_node), 0.01),
        'w_end_e': w(ks[8], (c_node, c_end)),
        'b_end_e': w(ks[9], (1, c_end), 0.01),
        'w_out_e': w(ks[10], (c_end, c_lat)),
        'b_out_e': w(ks[11], (1, c_lat), 0.01),
        # decoder: mirror
        'w_gcn_d': w(ks[12], (2 * c_lat, c_lat)),
        'b_gcn_d': w(ks[13], (1, c_lat), 0.01),
        'w_end_d': w(ks[14], (c_lat, c_end)),
        'b_end_d': w(ks[15], (1, c_end), 0.01),
        'w_out_d': w(ks[16], (c_end, c_node)),
        'b_out_d': w(ks[17], (1, c_node), 0.01),
        # conv_end: Conv2d(16, 1, (1,1))
        'w_cend': w(ks[18], (c_node, 1)),
        'b_cend': w(ks[19], (1, 1), 0.01),
    }


def embedding_graph(params, idx, graph_alpha=3.0, top_k=30):
    """MTGNN-style learned adjacency + mixprop row-normalization (JAX glue;
    tiny [N,N] setup + data-dependent top-k, not the hot path)."""
    e1 = params['emb1'][idx]
    e2 = params['emb2'][idx]
    nv1 = jnp.tanh(graph_alpha * (e1 @ params['lin1_w'] + params['lin1_b']))
    nv2 = jnp.tanh(graph_alpha * (e2 @ params['lin2_w'] + params['lin2_b']))
    a = jax.nn.relu(jnp.tanh(graph_alpha * (nv1 @ nv2.T - nv2 @ nv1.T)))
    n = a.shape[0]
    k = min(top_k, n)
    # TODO(synk): MTGNN adds random tie-break noise before top-k; omitted for determinism.
    _, inds = jax.lax.top_k(a, k)
    mask = jnp.zeros_like(a).at[jnp.arange(n)[:, None], inds].set(1.0)
    adj = a * mask
    adj = adj + jnp.eye(n, dtype=adj.dtype)            # self-loops (mixprop)
    return adj / jnp.sum(adj, axis=1, keepdims=True)   # row-normalized


# ---------------------------------- main ----------------------------------- #
if __name__ == "__main__":
    B, T, N = 2, 8, 8          # batch, seq_len, input_channel (= number of nodes)
    key = jax.random.PRNGKey(0)
    kx, kp = jax.random.split(key)

    x = jax.random.normal(kx, (B, T, N), dtype=jnp.float32)
    idx = jnp.arange(N)
    params = init_params(kp, N)

    A_norm = embedding_graph(params, idx, graph_alpha=3.0, top_k=30)
    fwd = jax.jit(astmad_forward)
    y = fwd(x, params, A_norm)
    y = jax.block_until_ready(y)

    assert y.shape == (B, T, N), y.shape
    assert bool(jnp.all(jnp.isfinite(y)))
    print("KERNEL_OK")
</pallas_src>

<mosaic_0001>
module attributes {stable_mosaic.version = 11 : i64} {
  func.func @astmad_kernel(%arg0: i32, %arg1: memref<128x1xf32, #tpu.memory_space<vmem>>, %arg2: memref<8x8xbf16, #tpu.memory_space<vmem>>, %arg3: memref<16x32xbf16, #tpu.memory_space<vmem>>, %arg4: memref<32x64xbf16, #tpu.memory_space<vmem>>, %arg5: memref<64x64xbf16, #tpu.memory_space<vmem>>, %arg6: memref<64x64xbf16, #tpu.memory_space<vmem>>, %arg7: memref<64x32xbf16, #tpu.memory_space<vmem>>, %arg8: memref<1x32xbf16, #tpu.memory_space<vmem>>, %arg9: memref<8x64xf32, #tpu.memory_space<vmem>>, %arg10: memref<1x128xf32, #tpu.memory_space<vmem>>) attributes {dimension_semantics = [#tpu.dimension_semantics<parallel>], iteration_bounds = array<i64: 1>, scalar_prefetch = 0 : i64, scratch_operands = 0 : i64, tpu.core_type = #tpu.core_type<tc>, window_params = [{transform_indices = @transform_0, window_bounds = array<i64: 128, 1>}, {pipeline_mode = #tpu.pipeline_mode<synchronous>, transform_indices = @transform_1, window_bounds = array<i64: 8, 8>}, {pipeline_mode = #tpu.pipeline_mode<synchronous>, transform_indices = @transform_2, window_bounds = array<i64: 16, 32>}, {pipeline_mode = #tpu.pipeline_mode<synchronous>, transform_indices = @transform_3, window_bounds = array<i64: 32, 64>}, {pipeline_mode = #tpu.pipeline_mode<synchronous>, transform_indices = @transform_4, window_bounds = array<i64: 64, 64>}, {pipeline_mode = #tpu.pipeline_mode<synchronous>, transform_indices = @transform_5, window_bounds = array<i64: 64, 64>}, {pipeline_mode = #tpu.pipeline_mode<synchronous>, transform_indices = @transform_6, window_bounds = array<i64: 64, 32>}, {pipeline_mode = #tpu.pipeline_mode<synchronous>, transform_indices = @transform_7, window_bounds = array<i64: 1, 32>}, {pipeline_mode = #tpu.pipeline_mode<synchronous>, transform_indices = @transform_8, window_bounds = array<i64: 8, 64>}, {transform_indices = @transform_9, window_bounds = array<i64: 1, 128>}]} {
    %c0 = arith.constant 0 : index
    %c0_0 = arith.constant 0 : index
    %0 = vector.load %arg9[%c0, %c0_0] : memref<8x64xf32, #tpu.memory_space<vmem>>, vector<8x64xf32>
    %1 = vector.extract_strided_slice %0 {offsets = [0, 0], sizes = [1, 16], strides = [1, 1]} : vector<8x64xf32> to vector<1x16xf32>
    %2 = vector.extract_strided_slice %0 {offsets = [1, 0], sizes = [1, 16], strides = [1, 1]} : vector<8x64xf32> to vector<1x16xf32>
    %3 = vector.extract_strided_slice %0 {offsets = [2, 0], sizes = [1, 16], strides = [1, 1]} : vector<8x64xf32> to vector<1x16xf32>
    %4 = vector.extract_strided_slice %0 {offsets = [3, 0], sizes = [1, 32], strides = [1, 1]} : vector<8x64xf32> to vector<1x32xf32>
    %5 = vector.extract_strided_slice %0 {offsets = [4, 0], sizes = [1, 64], strides = [1, 1]} : vector<8x64xf32> to vector<1x64xf32>
    %6 = vector.extract_strided_slice %0 {offsets = [5, 0], sizes = [1, 64], strides = [1, 1]} : vector<8x64xf32> to vector<1x64xf32>
    %7 = vector.extract_strided_slice %0 {offsets = [6, 0], sizes = [1, 32], strides = [1, 1]} : vector<8x64xf32> to vector<1x32xf32>
    %8 = vector.extract_strided_slice %0 {offsets = [7, 0], sizes = [1, 1], strides = [1, 1]} : vector<8x64xf32> to vector<1x1xf32>
    %c0_1 = arith.constant 0 : index
    %c0_2 = arith.constant 0 : index
    %9 = vector.load %arg2[%c0_1, %c0_2] : memref<8x8xbf16, #tpu.memory_space<vmem>>, vector<8x8xbf16>
    %10 = vector.shape_cast %9 : vector<8x8xbf16> to vector<1x8x8xbf16>
    %11 = vector.broadcast %10 : vector<1x8x8xbf16> to vector<16x8x8xbf16>
    %c0_3 = arith.constant 0 : index
    %c0_4 = arith.constant 0 : index
    %12 = vector.load %arg1[%c0_3, %c0_4] : memref<128x1xf32, #tpu.memory_space<vmem>>, vector<128x1xf32>
    %13 = arith.truncf %12 : vector<128x1xf32> to vector<128x1xbf16>
    %14 = vector.shape_cast %13 : vector<128x1xbf16> to vector<16x8x1xbf16>
    "tpu.trace_start"() <{level = 10 : i32, message = "gvw,gwc->gvc"}> : () -> ()
    %cst = arith.constant dense<0.000000e+00> : vector<16x8x1xf32>
    %15 = tpu.matmul %11, %14, %cst {dimension_numbers = #tpu.dot_dimension_numbers<[2], [1], [1], [2], [0, 0, 0, 1, 1, 2], [0], [0]>} : vector<16x8x8xbf16>, vector<16x8x1xbf16>, vector<16x8x1xf32> -> vector<16x8x1xf32>
    "tpu.trace_stop"() : () -> ()
    %16 = vector.shape_cast %15 : vector<16x8x1xf32> to vector<128x1xf32>
    %17 = vector.broadcast %12 : vector<128x1xf32> to vector<128x16xf32>
    %18 = vector.broadcast %1 : vector<1x16xf32> to vector<128x16xf32>
    %19 = arith.mulf %17, %18 : vector<128x16xf32>
    %20 = vector.broadcast %16 : vector<128x1xf32> to vector<128x16xf32>
    %21 = vector.broadcast %2 : vector<1x16xf32> to vector<128x16xf32>
    %22 = arith.mulf %20, %21 : vector<128x16xf32>
    %23 = arith.addf %19, %22 : vector<128x16xf32>
    %24 = vector.broadcast %3 : vector<1x16xf32> to vector<128x16xf32>
    %25 = arith.addf %23, %24 : vector<128x16xf32>
    %cst_5 = arith.constant 0.000000e+00 : f32
    %26 = vector.broadcast %cst_5 : f32 to vector<128x16xf32>
    %27 = arith.maximumf %25, %26 : vector<128x16xf32>
    %28 = arith.truncf %27 : vector<128x16xf32> to vector<128x16xbf16>
    %c0_6 = arith.constant 0 : index
    %c0_7 = arith.constant 0 : index
    %29 = vector.load %arg3[%c0_6, %c0_7] : memref<16x32xbf16, #tpu.memory_space<vmem>>, vector<16x32xbf16>
    %cst_8 = arith.constant dense<0.000000e+00> : vector<128x32xf32>
    %30 = tpu.matmul %28, %29, %cst_8 {dimension_numbers = #tpu.dot_dimension_numbers<[1], [0], [0], [1], [0, 0, 1, 1], [], []>} : vector<128x16xbf16>, vector<16x32xbf16>, vector<128x32xf32> -> vector<128x32xf32>
    %31 = vector.broadcast %4 : vector<1x32xf32> to vector<128x32xf32>
    %32 = arith.addf %30, %31 : vector<128x32xf32>
    %cst_9 = arith.constant 0.000000e+00 : f32
    %33 = vector.broadcast %cst_9 : f32 to vector<128x32xf32>
    %34 = arith.maximumf %32, %33 : vector<128x32xf32>
    %35 = arith.truncf %34 : vector<128x32xf32> to vector<128x32xbf16>
    %c0_10 = arith.constant 0 : index
    %c0_11 = arith.constant 0 : index
    %36 = vector.load %arg4[%c0_10, %c0_11] : memref<32x64xbf16, #tpu.memory_space<vmem>>, vector<32x64xbf16>
    %cst_12 = arith.constant dense<0.000000e+00> : vector<128x64xf32>
    %37 = tpu.matmul %35, %36, %cst_12 {dimension_numbers = #tpu.dot_dimension_numbers<[1], [0], [0], [1], [0, 0, 1, 1], [], []>} : vector<128x32xbf16>, vector<32x64xbf16>, vector<128x64xf32> -> vector<128x64xf32>
    %38 = vector.broadcast %5 : vector<1x64xf32> to vector<128x64xf32>
    %39 = arith.addf %37, %38 : vector<128x64xf32>
    %40 = arith.truncf %39 : vector<128x64xf32> to vector<128x64xbf16>
    %41 = vector.shape_cast %40 : vector<128x64xbf16> to vector<16x8x64xbf16>
    "tpu.trace_start"() <{level = 10 : i32, message = "gvw,gwc->gvc"}> : () -> ()
    %cst_13 = arith.constant dense<0.000000e+00> : vector<16x8x64xf32>
    %42 = tpu.matmul %11, %41, %cst_13 {dimension_numbers = #tpu.dot_dimension_numbers<[2], [1], [1], [2], [0, 0, 0, 1, 1, 2], [0], [0]>} : vector<16x8x8xbf16>, vector<16x8x64xbf16>, vector<16x8x64xf32> -> vector<16x8x64xf32>
    "tpu.trace_stop"() : () -> ()
    %43 = vector.shape_cast %42 : vector<16x8x64xf32> to vector<128x64xf32>
    %cst_14 = arith.constant 5.000000e-02 : f32
    %44 = vector.broadcast %cst_14 : f32 to vector<128x64xf32>
    %45 = arith.mulf %44, %39 : vector<128x64xf32>
    %cst_15 = arith.constant 0.949999988 : f32
    %46 = vector.broadcast %cst_15 : f32 to vector<128x64xf32>
    %47 = arith.mulf %46, %43 : vector<128x64xf32>
    %48 = arith.addf %45, %47 : vector<128x64xf32>
    %c0_16 = arith.constant 0 : index
    %c0_17 = arith.constant 0 : index
    %49 = vector.load %arg5[%c0_16, %c0_17] : memref<64x64xbf16, #tpu.memory_space<vmem>>, vector<64x64xbf16>
    %cst_18 = arith.constant dense<0.000000e+00> : vector<128x64xf32>
    %50 = tpu.matmul %40, %49, %cst_18 {dimension_numbers = #tpu.dot_dimension_numbers<[1], [0], [0], [1], [0, 0, 1, 1], [], []>} : vector<128x64xbf16>, vector<64x64xbf16>, vector<128x64xf32> -> vector<128x64xf32>
    %51 = arith.truncf %48 : vector<128x64xf32> to vector<128x64xbf16>
    %c0_19 = arith.constant 0 : index
    %c0_20 = arith.constant 0 : index
    %52 = vector.load %arg6[%c0_19, %c0_20] : memref<64x64xbf16, #tpu.memory_space<vmem>>, vector<64x64xbf16>
    %cst_21 = arith.constant dense<0.000000e+00> : vector<128x64xf32>
    %53 = tpu.matmul %51, %52, %cst_21 {dimension_numbers = #tpu.dot_dimension_numbers<[1], [0], [0], [1], [0, 0, 1, 1], [], []>} : vector<128x64xbf16>, vector<64x64xbf16>, vector<128x64xf32> -> vector<128x64xf32>
    %54 = arith.addf %50, %53 : vector<128x64xf32>
    %55 = vector.broadcast %6 : vector<1x64xf32> to vector<128x64xf32>
    %56 = arith.addf %54, %55 : vector<128x64xf32>
    %cst_22 = arith.constant 0.000000e+00 : f32
    %57 = vector.broadcast %cst_22 : f32 to vector<128x64xf32>
    %58 = arith.maximumf %56, %57 : vector<128x64xf32>
    %59 = arith.truncf %58 : vector<128x64xf32> to vector<128x64xbf16>
    %c0_23 = arith.constant 0 : index
    %c0_24 = arith.constant 0 : index
    %60 = vector.load %arg7[%c0_23, %c0_24] : memref<64x32xbf16, #tpu.memory_space<vmem>>, vector<64x32xbf16>
    %cst_25 = arith.constant dense<0.000000e+00> : vector<128x32xf32>
    %61 = tpu.matmul %59, %60, %cst_25 {dimension_numbers = #tpu.dot_dimension_numbers<[1], [0], [0], [1], [0, 0, 1, 1], [], []>} : vector<128x64xbf16>, vector<64x32xbf16>, vector<128x32xf32> -> vector<128x32xf32>
    %62 = vector.broadcast %7 : vector<1x32xf32> to vector<128x32xf32>
    %63 = arith.addf %61, %62 : vector<128x32xf32>
    %cst_26 = arith.constant 0.000000e+00 : f32
    %64 = vector.broadcast %cst_26 : f32 to vector<128x32xf32>
    %65 = arith.maximumf %63, %64 : vector<128x32xf32>
    %66 = tpu.transpose %65, [1, 0] : vector<128x32xf32> -> vector<32x128xf32>
    %67 = arith.truncf %66 : vector<32x128xf32> to vector<32x128xbf16>
    %c0_27 = arith.constant 0 : index
    %c0_28 = arith.constant 0 : index
    %68 = vector.load %arg8[%c0_27, %c0_28] : memref<1x32xbf16, #tpu.memory_space<vmem>>, vector<1x32xbf16>
    %cst_29 = arith.constant dense<0.000000e+00> : vector<1x128xf32>
    %69 = tpu.matmul %68, %67, %cst_29 {dimension_numbers = #tpu.dot_dimension_numbers<[1], [0], [0], [1], [0, 0, 1, 1], [], []>} : vector<1x32xbf16>, vector<32x128xbf16>, vector<1x128xf32> -> vector<1x128xf32>
    %70 = vector.broadcast %8 : vector<1x1xf32> to vector<1x128xf32>
    %71 = arith.addf %69, %70 : vector<1x128xf32>
    %c0_30 = arith.constant 0 : index
    %c0_31 = arith.constant 0 : index
    %72 = vector.load %arg10[%c0_30, %c0_31] : memref<1x128xf32, #tpu.memory_space<vmem>>, vector<1x128xf32>
    tpu.vector_store %arg10[%c0_30, %c0_31], %71 {strides = array<i32>} : memref<1x128xf32, #tpu.memory_space<vmem>>, vector<1x128xf32>,
    return
  }
  func.func @transform_0(%arg0: i32) -> (i32, i32) {
    %c0_i32 = arith.constant 0 : i32
    %c0_i32_0 = arith.constant 0 : i32
    return %arg0, %c0_i32 : i32, i32
  }
  func.func @transform_1(%arg0: i32) -> (i32, i32) {
    %c0_i32 = arith.constant 0 : i32
    %c0_i32_0 = arith.constant 0 : i32
    %c0_i32_1 = arith.constant 0 : i32
    return %c0_i32, %c0_i32_0 : i32, i32
  }
  func.func @transform_2(%arg0: i32) -> (i32, i32) {
    %c0_i32 = arith.constant 0 : i32
    %c0_i32_0 = arith.constant 0 : i32
    %c0_i32_1 = arith.constant 0 : i32
    return %c0_i32, %c0_i32_0 : i32, i32
  }
  func.func @transform_3(%arg0: i32) -> (i32, i32) {
    %c0_i32 = arith.constant 0 : i32
    %c0_i32_0 = arith.constant 0 : i32
    %c0_i32_1 = arith.constant 0 : i32
    return %c0_i32, %c0_i32_0 : i32, i32
  }
  func.func @transform_4(%arg0: i32) -> (i32, i32) {
    %c0_i32 = arith.constant 0 : i32
    %c0_i32_0 = arith.constant 0 : i32
    %c0_i32_1 = arith.constant 0 : i32
    return %c0_i32, %c0_i32_0 : i32, i32
  }
  func.func @transform_5(%arg0: i32) -> (i32, i32) {
    %c0_i32 = arith.constant 0 : i32
    %c0_i32_0 = arith.constant 0 : i32
    %c0_i32_1 = arith.constant 0 : i32
    return %c0_i32, %c0_i32_0 : i32, i32
  }
  func.func @transform_6(%arg0: i32) -> (i32, i32) {
    %c0_i32 = arith.constant 0 : i32
    %c0_i32_0 = arith.constant 0 : i32
    %c0_i32_1 = arith.constant 0 : i32
    return %c0_i32, %c0_i32_0 : i32, i32
  }
  func.func @transform_7(%arg0: i32) -> (i32, i32) {
    %c0_i32 = arith.constant 0 : i32
    %c0_i32_0 = arith.constant 0 : i32
    %c0_i32_1 = arith.constant 0 : i32
    return %c0_i32, %c0_i32_0 : i32, i32
  }
  func.func @transform_8(%arg0: i32) -> (i32, i32) {
    %c0_i32 = arith.constant 0 : i32
    %c0_i32_0 = arith.constant 0 : i32
    %c0_i32_1 = arith.constant 0 : i32
    return %c0_i32, %c0_i32_0 : i32, i32
  }
  func.func @transform_9(%arg0: i32) -> (i32, i32) {
    %c0_i32 = arith.constant 0 : i32
    %c0_i32_0 = arith.constant 0 : i32
    return %c0_i32, %arg0 : i32, i32
  }
}

</mosaic_0001>

<llo_original>
// kernel: astmad_forward.1
$region0: #{astmad_forward.1}
  #allocation0 [shape = 'u32[]', space=smem, size = 0x4, offset = 0x4, fixed_abs, tag = 'smem constant byte address 0x4 - core index']
  #allocation1 [shape = 'u32[144,128]{1,0:T(1,128)}', space=vmem, size = 0x12000, scoped, tag = 'internal scratch']
  %s0 = inlined_call_operand.vmem [shape: f32[128,1], index: 0, kind: input, shape index: {}]
  %s1 = inlined_call_operand.vmem [shape: bf16[8,8], index: 1, kind: input, shape index: {}]
  %s2 = inlined_call_operand.vmem [shape: bf16[16,32], index: 2, kind: input, shape index: {}]
  %s3 = inlined_call_operand.vmem [shape: bf16[32,64], index: 3, kind: input, shape index: {}]
  %s4 = inlined_call_operand.vmem [shape: bf16[64,64], index: 4, kind: input, shape index: {}]
  %s5 = inlined_call_operand.vmem [shape: bf16[64,64], index: 5, kind: input, shape index: {}]
  %s6 = inlined_call_operand.vmem [shape: bf16[64,32], index: 6, kind: input, shape index: {}]
  %s7 = inlined_call_operand.vmem [shape: bf16[1,32], index: 7, kind: input, shape index: {}]
  %s8 = inlined_call_operand.vmem [shape: f32[8,64], index: 8, kind: input, shape index: {}]
  %s9 = inlined_call_operand.vmem [shape: f32[1,128], index: 9, kind: output, shape index: {}]
  %s10 = sld [smem:[#allocation0]]
  $region46: #{astmad_forward.1} parent=0
    _
  %s12 = ssub.s32 1, %s10
  %s13 = scalar_select 0, %s12, %s10
  // Predicated region
  $region2: #{astmad_forward.1} parent=0 // pred_check
    _
  $region3: #{astmad_forward.1} parent=0 // pred_check_branch
    %15 = sbr.rel (0) target = $region5
  $region4: #{astmad_forward.1} parent=0 // pred_region
    _
  $region5: #{astmad_forward.1} parent=0 // pred_fallthru
    _
  // Predicated region
  $region6: #{astmad_forward.1} parent=0 // pred_check
    _
  $region7: #{astmad_forward.1} parent=0 // pred_check_branch
    %17 = sbr.rel (0) target = $region9
  $region8: #{astmad_forward.1} parent=0 // pred_region
    _
  $region9: #{astmad_forward.1} parent=0 // pred_fallthru
    _
  // Predicated region
  $region10: #{astmad_forward.1} parent=0 // pred_check
    _
  $region11: #{astmad_forward.1} parent=0 // pred_check_branch
    %19 = sbr.rel (0) target = $region13
  $region12: #{astmad_forward.1} parent=0 // pred_region
    _
  $region13: #{astmad_forward.1} parent=0 // pred_fallthru
    _
  // Predicated region
  $region14: #{astmad_forward.1} parent=0 // pred_check
    _
  $region15: #{astmad_forward.1} parent=0 // pred_check_branch
    %21 = sbr.rel (0) target = $region17
  $region16: #{astmad_forward.1} parent=0 // pred_region
    _
  $region17: #{astmad_forward.1} parent=0 // pred_fallthru
    _
  // Predicated region
  $region18: #{astmad_forward.1} parent=0 // pred_check
    _
  $region19: #{astmad_forward.1} parent=0 // pred_check_branch
    %23 = sbr.rel (0) target = $region21
  $region20: #{astmad_forward.1} parent=0 // pred_region
    _
  $region21: #{astmad_forward.1} parent=0 // pred_fallthru
    _
  // Predicated region
  $region22: #{astmad_forward.1} parent=0 // pred_check
    _
  $region23: #{astmad_forward.1} parent=0 // pred_check_branch
    %25 = sbr.rel (0) target = $region25
  $region24: #{astmad_forward.1} parent=0 // pred_region
    _
  $region25: #{astmad_forward.1} parent=0 // pred_fallthru
    _
  // Predicated region
  $region26: #{astmad_forward.1} parent=0 // pred_check
    _
  $region27: #{astmad_forward.1} parent=0 // pred_check_branch
    %27 = sbr.rel (0) target = $region29
  $region28: #{astmad_forward.1} parent=0 // pred_region
    _
  $region29: #{astmad_forward.1} parent=0 // pred_fallthru
    _
  // Predicated region
  $region30: #{astmad_forward.1} parent=0 // pred_check
    _
  $region31: #{astmad_forward.1} parent=0 // pred_check_branch
    %29 = sbr.rel (0) target = $region33
  $region32: #{astmad_forward.1} parent=0 // pred_region
    _
  $region33: #{astmad_forward.1} parent=0 // pred_fallthru
    _
  // Predicated region
  $region34: #{astmad_forward.1} parent=0 // pred_check
    _
  $region35: #{astmad_forward.1} parent=0 // pred_check_branch
    %31 = sbr.rel (0) target = $region37
  $region36: #{astmad_forward.1} parent=0 // pred_region
    _
  $region37: #{astmad_forward.1} parent=0 // pred_fallthru
    _
  %v33 = vld [vmem:[%s8] sm:$0xff]
  %v34 = vld [vmem:[%s1] sm:$0xf]
  %v35 = vld [vmem:[%s0] sm:$0xff]
  %v36 = vld [vmem:[%s0 + $0x8] sm:$0xff]
  %v37 = vld [vmem:[%s0 + $0x10] sm:$0xff]
  %v38 = vld [vmem:[%s0 + $0x18] sm:$0xff]
  %v39 = vld [vmem:[%s0 + $0x20] sm:$0xff]
  %v40 = vld [vmem:[%s0 + $0x28] sm:$0xff]
  %v41 = vld [vmem:[%s0 + $0x30] sm:$0xff]
  %v42 = vld [vmem:[%s0 + $0x38] sm:$0xff]
  %v43 = vld [vmem:[%s0 + $0x40] sm:$0xff]
  %v44 = vld [vmem:[%s0 + $0x48] sm:$0xff]
  %v45 = vld [vmem:[%s0 + $0x50] sm:$0xff]
  %v46 = vld [vmem:[%s0 + $0x58] sm:$0xff]
  %v47 = vld [vmem:[%s0 + $0x60] sm:$0xff]
  %v48 = vld [vmem:[%s0 + $0x68] sm:$0xff]
  %v49 = vld [vmem:[%s0 + $0x70] sm:$0xff]
  %v50 = vld [vmem:[%s0 + $0x78] sm:$0xff]
  %v51 = vpack.c.bf16 %v36, %v35
  %v52 = vpack.c.bf16 %v38, %v37
  %v53 = vpack.c.bf16 %v40, %v39
  %v54 = vpack.c.bf16 %v42, %v41
  %v55 = vpack.c.bf16 %v44, %v43
  %v56 = vpack.c.bf16 %v46, %v45
  %v57 = vpack.c.bf16 %v48, %v47
  %v58 = vpack.c.bf16 %v50, %v49
  %v67 = vunpack.c.l.b16 %v51
  %v68 = vunpack.c.h.b16 %v51
  %v69 = vunpack.c.l.b16 %v52
  %v70 = vunpack.c.h.b16 %v52
  %v71 = vunpack.c.l.b16 %v53
  %v72 = vunpack.c.h.b16 %v53
  %v73 = vunpack.c.l.b16 %v54
  %v74 = vunpack.c.h.b16 %v54
  %v75 = vunpack.c.l.b16 %v55
  %v76 = vunpack.c.h.b16 %v55
  %v77 = vunpack.c.l.b16 %v56
  %v78 = vunpack.c.h.b16 %v56
  %v79 = vunpack.c.l.b16 %v57
  %v80 = vunpack.c.h.b16 %v57
  %v81 = vunpack.c.l.b16 %v58
  %v82 = vunpack.c.h.b16 %v58
  %v83 = vpack.c.b16 %v67, %v67
  %v84 = vpack.c.b16 %v68, %v68
  %v85 = vpack.c.b16 %v69, %v69
  %v86 = vpack.c.b16 %v70, %v70
  %v87 = vpack.c.b16 %v71, %v71
  %v88 = vpack.c.b16 %v72, %v72
  %v89 = vpack.c.b16 %v73, %v73
  %v90 = vpack.c.b16 %v74, %v74
  %v91 = vpack.c.b16 %v75, %v75
  %v92 = vpack.c.b16 %v76, %v76
  %v93 = vpack.c.b16 %v77, %v77
  %v94 = vpack.c.b16 %v78, %v78
  %v95 = vpack.c.b16 %v79, %v79
  %v96 = vpack.c.b16 %v80, %v80
  %v97 = vpack.c.b16 %v81, %v81
  %v98 = vpack.c.b16 %v82, %v82
  %vm99 = vcmask 64512
  %v101 = vsel %vm99, %v34, 0
  %vm103 = vcmask 1043456
  %v105 = vsel %vm103, %v83, 0
  %107 = vmatprep.subr.bf16.mxu0 0
  %108 = vmatpush1.bf16.msra.mxu0 0
  %109 = vmatprep.subr.bf16.mxu0 0
  %110 = vmatpush1.bf16.msra.mxu0 0
  %111 = vmatprep.subr.bf16.mxu0 0
  %112 = vmatpush1.bf16.msra.mxu0 0
  %113 = vmatprep.subr.bf16.mxu0 0
  %114 = vmatpush1.bf16.msra.mxu0 0
  %115 = vmatprep.subr.bf16.mxu0 0
  %116 = vmatpush1.bf16.msra.mxu0 0
  %117 = vmatprep.subr.bf16.mxu0 0
  %118 = vmatpush1.bf16.msra.mxu0 0
  %119 = vmatprep.subr.bf16.mxu0 0
  %120 = vmatpush1.bf16.msra.mxu0 0
  %121 = vmatprep.subr.bf16.mxu0 0
  %122 = vmatpush1.bf16.msra.mxu0 %v105
  %123 = vmatprep.subr.bf16.mxu0 0
  %124 = vmatpush2.bf16.msra.mxu0 0
  %125 = vmatprep.subr.bf16.mxu0 0
  %126 = vmatpush2.bf16.msra.mxu0 0
  %127 = vmatprep.subr.bf16.mxu0 0
  %128 = vmatpush2.bf16.msra.mxu0 0
  %129 = vmatprep.subr.bf16.mxu0 0
  %130 = vmatpush2.bf16.msra.mxu0 0
  %131 = vmatprep.subr.bf16.mxu0 0
  %132 = vmatpush2.bf16.msra.mxu0 0
  %133 = vmatprep.subr.bf16.mxu0 0
  %134 = vmatpush2.bf16.msra.mxu0 0
  %135 = vmatprep.subr.bf16.mxu0 0
  %136 = vmatpush2.bf16.msra.mxu0 0
  %137 = vmatprep.subr.bf16.mxu0 0
  %138 = vmatpush2.bf16.msra.mxu0 0
  %139 = vmatprep.mubr.bf16.mxu0 0
  %140 = vmatmul.mubr.bf16.gmra.mxu0 %v101
  %v141 = vpop.f32.mrf.mxu0
  %v142 = vadd.f32 0.0, %v141
  %v143 = vpop.f32.mrf.mxu0
  %v144 = vpop.f32.mrf.mxu0
  %v145 = vpop.f32.mrf.mxu0
  %146 = vdwg.mxu0
  %v148 = vsel %vm103, %v84, 0
  %150 = vmatprep.subr.bf16.mxu0 0
  %151 = vmatpush1.bf16.msra.mxu0 0
  %152 = vmatprep.subr.bf16.mxu0 0
  %153 = vmatpush1.bf16.msra.mxu0 0
  %154 = vmatprep.subr.bf16.mxu0 0
  %155 = vmatpush1.bf16.msra.mxu0 0
  %156 = vmatprep.subr.bf16.mxu0 0
  %157 = vmatpush1.bf16.msra.mxu0 0
  %158 = vmatprep.subr.bf16.mxu0 0
  %159 = vmatpush1.bf16.msra.mxu0 0
  %160 = vmatprep.subr.bf16.mxu0 0
  %161 = vmatpush1.bf16.msra.mxu0 0
  %162 = vmatprep.subr.bf16.mxu0 0
  %163 = vmatpush1.bf16.msra.mxu0 0
  %164 = vmatprep.subr.bf16.mxu0 0
  %165 = vmatpush1.bf16.msra.mxu0 %v148
  %166 = vmatprep.subr.bf16.mxu0 0
  %167 = vmatpush2.bf16.msra.mxu0 0
  %168 = vmatprep.subr.bf16.mxu0 0
  %169 = vmatpush2.bf16.msra.mxu0 0
  %170 = vmatprep.subr.bf16.mxu0 0
  %171 = vmatpush2.bf16.msra.mxu0 0
  %172 = vmatprep.subr.bf16.mxu0 0
  %173 = vmatpush2.bf16.msra.mxu0 0
  %174 = vmatprep.subr.bf16.mxu0 0
  %175 = vmatpush2.bf16.msra.mxu0 0
  %176 = vmatprep.subr.bf16.mxu0 0
  %177 = vmatpush2.bf16.msra.mxu0 0
  %178 = vmatprep.subr.bf16.mxu0 0
  %179 = vmatpush2.bf16.msra.mxu0 0
  %180 = vmatprep.subr.bf16.mxu0 0
  %181 = vmatpush2.bf16.msra.mxu0 0
  %182 = vmatprep.mubr.bf16.mxu0 0
  %183 = vmatmul.mubr.bf16.gmra.mxu0 %v101
  %v184 = vpop.f32.mrf.mxu0
  %v185 = vadd.f32 0.0, %v184
  %v186 = vpop.f32.mrf.mxu0
  %v187 = vpop.f32.mrf.mxu0
  %v188 = vpop.f32.mrf.mxu0
  %189 = vdwg.mxu0
  %v191 = vsel %vm103, %v85, 0
  %193 = vmatprep.subr.bf16.mxu0 0
  %194 = vmatpush1.bf16.msra.mxu0 0
  %195 = vmatprep.subr.bf16.mxu0 0
  %196 = vmatpush1.bf16.msra.mxu0 0
  %197 = vmatprep.subr.bf16.mxu0 0
  %198 = vmatpush1.bf16.msra.mxu0 0
  %199 = vmatprep.subr.bf16.mxu0 0
  %200 = vmatpush1.bf16.msra.mxu0 0
  %201 = vmatprep.subr.bf16.mxu0 0
  %202 = vmatpush1.bf16.msra.mxu0 0
  %203 = vmatprep.subr.bf16.mxu0 0
  %204 = vmatpush1.bf16.msra.mxu0 0
  %205 = vmatprep.subr.bf16.mxu0 0
  %206 = vmatpush1.bf16.msra.mxu0 0
  %207 = vmatprep.subr.bf16.mxu0 0
  %208 = vmatpush1.bf16.msra.mxu0 %v191
  %209 = vmatprep.subr.bf16.mxu0 0
  %210 = vmatpush2.bf16.msra.mxu0 0
  %211 = vmatprep.subr.bf16.mxu0 0
  %212 = vmatpush2.bf16.msra.mxu0 0
  %213 = vmatprep.subr.bf16.mxu0 0
  %214 = vmatpush2.bf16.msra.mxu0 0
  %215 = vmatprep.subr.bf16.mxu0 0
  %216 = vmatpush2.bf16.msra.mxu0 0
  %217 = vmatprep.subr.bf16.mxu0 0
  %218 = vmatpush2.bf16.msra.mxu0 0
  %219 = vmatprep.subr.bf16.mxu0 0
  %220 = vmatpush2.bf16.msra.mxu0 0
  %221 = vmatprep.subr.bf16.mxu0 0
  %222 = vmatpush2.bf16.msra.mxu0 0
  %223 = vmatprep.subr.bf16.mxu0 0
  %224 = vmatpush2.bf16.msra.mxu0 0
  %225 = vmatprep.mubr.bf16.mxu0 0
  %226 = vmatmul.mubr.bf16.gmra.mxu0 %v101
  %v227 = vpop.f32.mrf.mxu0
  %v228 = vadd.f32 0.0, %v227
  %v229 = vpop.f32.mrf.mxu0
  %v230 = vpop.f32.mrf.mxu0
  %v231 = vpop.f32.mrf.mxu0
  %232 = vdwg.mxu0
  %v234 = vsel %vm103, %v86, 0
  %236 = vmatprep.subr.bf16.mxu0 0
  %237 = vmatpush1.bf16.msra.mxu0 0
  %238 = vmatprep.subr.bf16.mxu0 0
  %239 = vmatpush1.bf16.msra.mxu0 0
  %240 = vmatprep.subr.bf16.mxu0 0
  %241 = vmatpush1.bf16.msra.mxu0 0
  %242 = vmatprep.subr.bf16.mxu0 0
  %243 = vmatpush1.bf16.msra.mxu0 0
  %244 = vmatprep.subr.bf16.mxu0 0
  %245 = vmatpush1.bf16.msra.mxu0 0
  %246 = vmatprep.subr.bf16.mxu0 0
  %247 = vmatpush1.bf16.msra.mxu0 0
  %248 = vmatprep.subr.bf16.mxu0 0
  %249 = vmatpush1.bf16.msra.mxu0 0
  %250 = vmatprep.subr.bf16.mxu0 0
  %251 = vmatpush1.bf16.msra.mxu0 %v234
  %252 = vmatprep.subr.bf16.mxu0 0
  %253 = vmatpush2.bf16.msra.mxu0 0
  %254 = vmatprep.subr.bf16.mxu0 0
  %255 = vmatpush2.bf16.msra.mxu0 0
  %256 = vmatprep.subr.bf16.mxu0 0
  %257 = vmatpush2.bf16.msra.mxu0 0
  %258 = vmatprep.subr.bf16.mxu0 0
  %259 = vmatpush2.bf16.msra.mxu0 0
  %260 = vmatprep.subr.bf16.mxu0 0
  %261 = vmatpush2.bf16.msra.mxu0 0
  %262 = vmatprep.subr.bf16.mxu0 0
  %263 = vmatpush2.bf16.msra.mxu0 0
  %264 = vmatprep.subr.bf16.mxu0 0
  %265 = vmatpush2.bf16.msra.mxu0 0
  %266 = vmatprep.subr.bf16.mxu0 0
  %267 = vmatpush2.bf16.msra.mxu0 0
  %268 = vmatprep.mubr.bf16.mxu0 0
  %269 = vmatmul.mubr.bf16.gmra.mxu0 %v101
  %v270 = vpop.f32.mrf.mxu0
  %v271 = vadd.f32 0.0, %v270
  %v272 = vpop.f32.mrf.mxu0
  %v273 = vpop.f32.mrf.mxu0
  %v274 = vpop.f32.mrf.mxu0
  %275 = vdwg.mxu0
  %v277 = vsel %vm103, %v87, 0
  %279 = vmatprep.subr.bf16.mxu0 0
  %280 = vmatpush1.bf16.msra.mxu0 0
  %281 = vmatprep.subr.bf16.mxu0 0
  %282 = vmatpush1.bf16.msra.mxu0 0
  %283 = vmatprep.subr.bf16.mxu0 0
  %284 = vmatpush1.bf16.msra.mxu0 0
  %285 = vmatprep.subr.bf16.mxu0 0
  %286 = vmatpush1.bf16.msra.mxu0 0
  %287 = vmatprep.subr.bf16.mxu0 0
  %288 = vmatpush1.bf16.msra.mxu0 0
  %289 = vmatprep.subr.bf16.mxu0 0
  %290 = vmatpush1.bf16.msra.mxu0 0
  %291 = vmatprep.subr.bf16.mxu0 0
  %292 = vmatpush1.bf16.msra.mxu0 0
  %293 = vmatprep.subr.bf16.mxu0 0
  %294 = vmatpush1.bf16.msra.mxu0 %v277
  %295 = vmatprep.subr.bf16.mxu0 0
  %296 = vmatpush2.bf16.msra.mxu0 0
  %297 = vmatprep.subr.bf16.mxu0 0
  %298 = vmatpush2.bf16.msra.mxu0 0
  %299 = vmatprep.subr.bf16.mxu0 0
  %300 = vmatpush2.bf16.msra.mxu0 0
  %301 = vmatprep.subr.bf16.mxu0 0
  %302 = vmatpush2.bf16.msra.mxu0 0
  %303 = vmatprep.subr.bf16.mxu0 0
  %304 = vmatpush2.bf16.msra.mxu0 0
  %305 = vmatprep.subr.bf16.mxu0 0
  %306 = vmatpush2.bf16.msra.mxu0 0
  %307 = vmatprep.subr.bf16.mxu0 0
  %308 = vmatpush2.bf16.msra.mxu0 0
  %309 = vmatprep.subr.bf16.mxu0 0
  %310 = vmatpush2.bf16.msra.mxu0 0
  %311 = vmatprep.mubr.bf16.mxu0 0
  %312 = vmatmul.mubr.bf16.gmra.mxu0 %v101
  %v313 = vpop.f32.mrf.mxu0
  %v314 = vadd.f32 0.0, %v313
  %v315 = vpop.f32.mrf.mxu0
  %v316 = vpop.f32.mrf.mxu0
  %v317 = vpop.f32.mrf.mxu0
  %318 = vdwg.mxu0
  %v320 = vsel %vm103, %v88, 0
  %322 = vmatprep.subr.bf16.mxu0 0
  %323 = vmatpush1.bf16.msra.mxu0 0
  %324 = vmatprep.subr.bf16.mxu0 0
  %325 = vmatpush1.bf16.msra.mxu0 0
  %326 = vmatprep.subr.bf16.mxu0 0
  %327 = vmatpush1.bf16.msra.mxu0 0
  %328 = vmatprep.subr.bf16.mxu0 0
  %329 = vmatpush1.bf16.msra.mxu0 0
  %330 = vmatprep.subr.bf16.mxu0 0
  %331 = vmatpush1.bf16.msra.mxu0 0
  %332 = vmatprep.subr.bf16.mxu0 0
  %333 = vmatpush1.bf16.msra.mxu0 0
  %334 = vmatprep.subr.bf16.mxu0 0
  %335 = vmatpush1.bf16.msra.mxu0 0
  %336 = vmatprep.subr.bf16.mxu0 0
  %337 = vmatpush1.bf16.msra.mxu0 %v320
  %338 = vmatprep.subr.bf16.mxu0 0
  %339 = vmatpush2.bf16.msra.mxu0 0
  %340 = vmatprep.subr.bf16.mxu0 0
  %341 = vmatpush2.bf16.msra.mxu0 0
  %342 = vmatprep.subr.bf16.mxu0 0
  %343 = vmatpush2.bf16.msra.mxu0 0
  %344 = vmatprep.subr.bf16.mxu0 0
  %345 = vmatpush2.bf16.msra.mxu0 0
  %346 = vmatprep.subr.bf16.mxu0 0
  %347 = vmatpush2.bf16.msra.mxu0 0
  %348 = vmatprep.subr.bf16.mxu0 0
  %349 = vmatpush2.bf16.msra.mxu0 0
  %350 = vmatprep.subr.bf16.mxu0 0
  %351 = vmatpush2.bf16.msra.mxu0 0
  %352 = vmatprep.subr.bf16.mxu0 0
  %353 = vmatpush2.bf16.msra.mxu0 0
  %354 = vmatprep.mubr.bf16.mxu0 0
  %355 = vmatmul.mubr.bf16.gmra.mxu0 %v101
  %v356 = vpop.f32.mrf.mxu0
  %v357 = vadd.f32 0.0, %v356
  %v358 = vpop.f32.mrf.mxu0
  %v359 = vpop.f32.mrf.mxu0
  %v360 = vpop.f32.mrf.mxu0
  %361 = vdwg.mxu0
  %v363 = vsel %vm103, %v89, 0
  %365 = vmatprep.subr.bf16.mxu0 0
  %366 = vmatpush1.bf16.msra.mxu0 0
  %367 = vmatprep.subr.bf16.mxu0 0
  %368 = vmatpush1.bf16.msra.mxu0 0
  %369 = vmatprep.subr.bf16.mxu0 0
  %370 = vmatpush1.bf16.msra.mxu0 0
  %371 = vmatprep.subr.bf16.mxu0 0
  %372 = vmatpush1.bf16.msra.mxu0 0
  %373 = vmatprep.subr.bf16.mxu0 0
  %374 = vmatpush1.bf16.msra.mxu0 0
  %375 = vmatprep.subr.bf16.mxu0 0
  %376 = vmatpush1.bf16.msra.mxu0 0
  %377 = vmatprep.subr.bf16.mxu0 0
  %378 = vmatpush1.bf16.msra.mxu0 0
  %379 = vmatprep.subr.bf16.mxu0 0
  %380 = vmatpush1.bf16.msra.mxu0 %v363
  %381 = vmatprep.subr.bf16.mxu0 0
  %382 = vmatpush2.bf16.msra.mxu0 0
  %383 = vmatprep.subr.bf16.mxu0 0
  %384 = vmatpush2.bf16.msra.mxu0 0
  %385 = vmatprep.subr.bf16.mxu0 0
  %386 = vmatpush2.bf16.msra.mxu0 0
  %387 = vmatprep.subr.bf16.mxu0 0
  %388 = vmatpush2.bf16.msra.mxu0 0
  %389 = vmatprep.subr.bf16.mxu0 0
  %390 = vmatpush2.bf16.msra.mxu0 0
  %391 = vmatprep.subr.bf16.mxu0 0
  %392 = vmatpush2.bf16.msra.mxu0 0
  %393 = vmatprep.subr.bf16.mxu0 0
  %394 = vmatpush2.bf16.msra.mxu0 0
  %395 = vmatprep.subr.bf16.mxu0 0
  %396 = vmatpush2.bf16.msra.mxu0 0
  %397 = vmatprep.mubr.bf16.mxu0 0
  %398 = vmatmul.mubr.bf16.gmra.mxu0 %v101
  %v399 = vpop.f32.mrf.mxu0
  %v400 = vadd.f32 0.0, %v399
  %v401 = vpop.f32.mrf.mxu0
  %v402 = vpop.f32.mrf.mxu0
  %v403 = vpop.f32.mrf.mxu0
  %404 = vdwg.mxu0
  %v406 = vsel %vm103, %v90, 0
  %408 = vmatprep.subr.bf16.mxu0 0
  %409 = vmatpush1.bf16.msra.mxu0 0
  %410 = vmatprep.subr.bf16.mxu0 0
  %411 = vmatpush1.bf16.msra.mxu0 0
  %412 = vmatprep.subr.bf16.mxu0 0
  %413 = vmatpush1.bf16.msra.mxu0 0
  %414 = vmatprep.subr.bf16.mxu0 0
  %415 = vmatpush1.bf16.msra.mxu0 0
  %416 = vmatprep.subr.bf16.mxu0 0
  %417 = vmatpush1.bf16.msra.mxu0 0
  %418 = vmatprep.subr.bf16.mxu0 0
  %419 = vmatpush1.bf16.msra.mxu0 0
  %420 = vmatprep.subr.bf16.mxu0 0
  %421 = vmatpush1.bf16.msra.mxu0 0
  %422 = vmatprep.subr.bf16.mxu0 0
  %423 = vmatpush1.bf16.msra.mxu0 %v406
  %424 = vmatprep.subr.bf16.mxu0 0
  %425 = vmatpush2.bf16.msra.mxu0 0
  %426 = vmatprep.subr.bf16.mxu0 0
  %427 = vmatpush2.bf16.msra.mxu0 0
  %428 = vmatprep.subr.bf16.mxu0 0
  %429 = vmatpush2.bf16.msra.mxu0 0
  %430 = vmatprep.subr.bf16.mxu0 0
  %431 = vmatpush2.bf16.msra.mxu0 0
  %432 = vmatprep.subr.bf16.mxu0 0
  %433 = vmatpush2.bf16.msra.mxu0 0
  %434 = vmatprep.subr.bf16.mxu0 0
  %435 = vmatpush2.bf16.msra.mxu0 0
  %436 = vmatprep.subr.bf16.mxu0 0
  %437 = vmatpush2.bf16.msra.mxu0 0
  %438 = vmatprep.subr.bf16.mxu0 0
  %439 = vmatpush2.bf16.msra.mxu0 0
  %440 = vmatprep.mubr.bf16.mxu0 0
  %441 = vmatmul.mubr.bf16.gmra.mxu0 %v101
  %v442 = vpop.f32.mrf.mxu0
  %v443 = vadd.f32 0.0, %v442
  %v444 = vpop.f32.mrf.mxu0
  %v445 = vpop.f32.mrf.mxu0
  %v446 = vpop.f32.mrf.mxu0
  %447 = vdwg.mxu0
  %v449 = vsel %vm103, %v91, 0
  %451 = vmatprep.subr.bf16.mxu0 0
  %452 = vmatpush1.bf16.msra.mxu0 0
  %453 = vmatprep.subr.bf16.mxu0 0
  %454 = vmatpush1.bf16.msra.mxu0 0
  %455 = vmatprep.subr.bf16.mxu0 0
  %456 = vmatpush1.bf16.msra.mxu0 0
  %457 = vmatprep.subr.bf16.mxu0 0
  %458 = vmatpush1.bf16.msra.mxu0 0
  %459 = vmatprep.subr.bf16.mxu0 0
  %460 = vmatpush1.bf16.msra.mxu0 0
  %461 = vmatprep.subr.bf16.mxu0 0
  %462 = vmatpush1.bf16.msra.mxu0 0
  %463 = vmatprep.subr.bf16.mxu0 0
  %464 = vmatpush1.bf16.msra.mxu0 0
  %465 = vmatprep.subr.bf16.mxu0 0
  %466 = vmatpush1.bf16.msra.mxu0 %v449
  %467 = vmatprep.subr.bf16.mxu0 0
  %468 = vmatpush2.bf16.msra.mxu0 0
  %469 = vmatprep.subr.bf16.mxu0 0
  %470 = vmatpush2.bf16.msra.mxu0 0
  %471 = vmatprep.subr.bf16.mxu0 0
  %472 = vmatpush2.bf16.msra.mxu0 0
  %473 = vmatprep.subr.bf16.mxu0 0
  %474 = vmatpush2.bf16.msra.mxu0 0
  %475 = vmatprep.subr.bf16.mxu0 0
  %476 = vmatpush2.bf16.msra.mxu0 0
  %477 = vmatprep.subr.bf16.mxu0 0
  %478 = vmatpush2.bf16.msra.mxu0 0
  %479 = vmatprep.subr.bf16.mxu0 0
  %480 = vmatpush2.bf16.msra.mxu0 0
  %481 = vmatprep.subr.bf16.mxu0 0
  %482 = vmatpush2.bf16.msra.mxu0 0
  %483 = vmatprep.mubr.bf16.mxu0 0
  %484 = vmatmul.mubr.bf16.gmra.mxu0 %v101
  %v485 = vpop.f32.mrf.mxu0
  %v486 = vadd.f32 0.0, %v485
  %v487 = vpop.f32.mrf.mxu0
  %v488 = vpop.f32.mrf.mxu0
  %v489 = vpop.f32.mrf.mxu0
  %490 = vdwg.mxu0
  %v492 = vsel %vm103, %v92, 0
  %494 = vmatprep.subr.bf16.mxu0 0
  %495 = vmatpush1.bf16.msra.mxu0 0
  %496 = vmatprep.subr.bf16.mxu0 0
  %497 = vmatpush1.bf16.msra.mxu0 0
  %498 = vmatprep.subr.bf16.mxu0 0
  %499 = vmatpush1.bf16.msra.mxu0 0
  %500 = vmatprep.subr.bf16.mxu0 0
  %501 = vmatpush1.bf16.msra.mxu0 0
  %502 = vmatprep.subr.bf16.mxu0 0
  %503 = vmatpush1.bf16.msra.mxu0 0
  %504 = vmatprep.subr.bf16.mxu0 0
  %505 = vmatpush1.bf16.msra.mxu0 0
  %506 = vmatprep.subr.bf16.mxu0 0
  %507 = vmatpush1.bf16.msra.mxu0 0
  %508 = vmatprep.subr.bf16.mxu0 0
  %509 = vmatpush1.bf16.msra.mxu0 %v492
  %510 = vmatprep.subr.bf16.mxu0 0
  %511 = vmatpush2.bf16.msra.mxu0 0
  %512 = vmatprep.subr.bf16.mxu0 0
  %513 = vmatpush2.bf16.msra.mxu0 0
  %514 = vmatprep.subr.bf16.mxu0 0
  %515 = vmatpush2.bf16.msra.mxu0 0
  %516 = vmatprep.subr.bf16.mxu0 0
  %517 = vmatpush2.bf16.msra.mxu0 0
  %518 = vmatprep.subr.bf16.mxu0 0
  %519 = vmatpush2.bf16.msra.mxu0 0
  %520 = vmatprep.subr.bf16.mxu0 0
  %521 = vmatpush2.bf16.msra.mxu0 0
  %522 = vmatprep.subr.bf16.mxu0 0
  %523 = vmatpush2.bf16.msra.mxu0 0
  %524 = vmatprep.subr.bf16.mxu0 0
  %525 = vmatpush2.bf16.msra.mxu0 0
  %526 = vmatprep.mubr.bf16.mxu0 0
  %527 = vmatmul.mubr.bf16.gmra.mxu0 %v101
  %v528 = vpop.f32.mrf.mxu0
  %v529 = vadd.f32 0.0, %v528
  %v530 = vpop.f32.mrf.mxu0
  %v531 = vpop.f32.mrf.mxu0
  %v532 = vpop.f32.mrf.mxu0
  %533 = vdwg.mxu0
  %v535 = vsel %vm103, %v93, 0
  %537 = vmatprep.subr.bf16.mxu0 0
  %538 = vmatpush1.bf16.msra.mxu0 0
  %539 = vmatprep.subr.bf16.mxu0 0
  %540 = vmatpush1.bf16.msra.mxu0 0
  %541 = vmatprep.subr.bf16.mxu0 0
  %542 = vmatpush1.bf16.msra.mxu0 0
  %543 = vmatprep.subr.bf16.mxu0 0
  %544 = vmatpush1.bf16.msra.mxu0 0
  %545 = vmatprep.subr.bf16.mxu0 0
  %546 = vmatpush1.bf16.msra.mxu0 0
  %547 = vmatprep.subr.bf16.mxu0 0
  %548 = vmatpush1.bf16.msra.mxu0 0
  %549 = vmatprep.subr.bf16.mxu0 0
  %550 = vmatpush1.bf16.msra.mxu0 0
  %551 = vmatprep.subr.bf16.mxu0 0
  %552 = vmatpush1.bf16.msra.mxu0 %v535
  %553 = vmatprep.subr.bf16.mxu0 0
  %554 = vmatpush2.bf16.msra.mxu0 0
  %555 = vmatprep.subr.bf16.mxu0 0
  %556 = vmatpush2.bf16.msra.mxu0 0
  %557 = vmatprep.subr.bf16.mxu0 0
  %558 = vmatpush2.bf16.msra.mxu0 0
  %559 = vmatprep.subr.bf16.mxu0 0
  %560 = vmatpush2.bf16.msra.mxu0 0
  %561 = vmatprep.subr.bf16.mxu0 0
  %562 = vmatpush2.bf16.msra.mxu0 0
  %563 = vmatprep.subr.bf16.mxu0 0
  %564 = vmatpush2.bf16.msra.mxu0 0
  %565 = vmatprep.subr.bf16.mxu0 0
  %566 = vmatpush2.bf16.msra.mxu0 0
  %567 = vmatprep.subr.bf16.mxu0 0
  %568 = vmatpush2.bf16.msra.mxu0 0
  %569 = vmatprep.mubr.bf16.mxu0 0
  %570 = vmatmul.mubr.bf16.gmra.mxu0 %v101
  %v571 = vpop.f32.mrf.mxu0
  %v572 = vadd.f32 0.0, %v571
  %v573 = vpop.f32.mrf.mxu0
  %v574 = vpop.f32.mrf.mxu0
  %v575 = vpop.f32.mrf.mxu0
  %576 = vdwg.mxu0
  %v578 = vsel %vm103, %v94, 0
  %580 = vmatprep.subr.bf16.mxu0 0
  %581 = vmatpush1.bf16.msra.mxu0 0
  %582 = vmatprep.subr.bf16.mxu0 0
  %583 = vmatpush1.bf16.msra.mxu0 0
  %584 = vmatprep.subr.bf16.mxu0 0
  %585 = vmatpush1.bf16.msra.mxu0 0
  %586 = vmatprep.subr.bf16.mxu0 0
  %587 = vmatpush1.bf16.msra.mxu0 0
  %588 = vmatprep.subr.bf16.mxu0 0
  %589 = vmatpush1.bf16.msra.mxu0 0
  %590 = vmatprep.subr.bf16.mxu0 0
  %591 = vmatpush1.bf16.msra.mxu0 0
  %592 = vmatprep.subr.bf16.mxu0 0
  %593 = vmatpush1.bf16.msra.mxu0 0
  %594 = vmatprep.subr.bf16.mxu0 0
  %595 = vmatpush1.bf16.msra.mxu0 %v578
  %596 = vmatprep.subr.bf16.mxu0 0
  %597 = vmatpush2.bf16.msra.mxu0 0
  %598 = vmatprep.subr.bf16.mxu0 0
  %599 = vmatpush2.bf16.msra.mxu0 0
  %600 = vmatprep.subr.bf16.mxu0 0
  %601 = vmatpush2.bf16.msra.mxu0 0
  %602 = vmatprep.subr.bf16.mxu0 0
  %603 = vmatpush2.bf16.msra.mxu0 0
  %604 = vmatprep.subr.bf16.mxu0 0
  %605 = vmatpush2.bf16.msra.mxu0 0
  %606 = vmatprep.subr.bf16.mxu0 0
  %607 = vmatpush2.bf16.msra.mxu0 0
  %608 = vmatprep.subr.bf16.mxu0 0
  %609 = vmatpush2.bf16.msra.mxu0 0
  %610 = vmatprep.subr.bf16.mxu0 0
  %611 = vmatpush2.bf16.msra.mxu0 0
  %612 = vmatprep.mubr.bf16.mxu0 0
  %613 = vmatmul.mubr.bf16.gmra.mxu0 %v101
  %v614 = vpop.f32.mrf.mxu0
  %v615 = vadd.f32 0.0, %v614
  %v616 = vpop.f32.mrf.mxu0
  %v617 = vpop.f32.mrf.mxu0
  %v618 = vpop.f32.mrf.mxu0
  %619 = vdwg.mxu0
  %v621 = vsel %vm103, %v95, 0
  %623 = vmatprep.subr.bf16.mxu0 0
  %624 = vmatpush1.bf16.msra.mxu0 0
  %625 = vmatprep.subr.bf16.mxu0 0
  %626 = vmatpush1.bf16.msra.mxu0 0
  %627 = vmatprep.subr.bf16.mxu0 0
  %628 = vmatpush1.bf16.msra.mxu0 0
  %629 = vmatprep.subr.bf16.mxu0 0
  %630 = vmatpush1.bf16.msra.mxu0 0
  %631 = vmatprep.subr.bf16.mxu0 0
  %632 = vmatpush1.bf16.msra.mxu0 0
  %633 = vmatprep.subr.bf16.mxu0 0
  %634 = vmatpush1.bf16.msra.mxu0 0
  %635 = vmatprep.subr.bf16.mxu0 0
  %636 = vmatpush1.bf16.msra.mxu0 0
  %637 = vmatprep.subr.bf16.mxu0 0
  %638 = vmatpush1.bf16.msra.mxu0 %v621
  %639 = vmatprep.subr.bf16.mxu0 0
  %640 = vmatpush2.bf16.msra.mxu0 0
  %641 = vmatprep.subr.bf16.mxu0 0
  %642 = vmatpush2.bf16.msra.mxu0 0
  %643 = vmatprep.subr.bf16.mxu0 0
  %644 = vmatpush2.bf16.msra.mxu0 0
  %645 = vmatprep.subr.bf16.mxu0 0
  %646 = vmatpush2.bf16.msra.mxu0 0
  %647 = vmatprep.subr.bf16.mxu0 0
  %648 = vmatpush2.bf16.msra.mxu0 0
  %649 = vmatprep.subr.bf16.mxu0 0
  %650 = vmatpush2.bf16.msra.mxu0 0
  %651 = vmatprep.subr.bf16.mxu0 0
  %652 = vmatpush2.bf16.msra.mxu0 0
  %653 = vmatprep.subr.bf16.mxu0 0
  %654 = vmatpush2.bf16.msra.mxu0 0
  %655 = vmatprep.mubr.bf16.mxu0 0
  %656 = vmatmul.mubr.bf16.gmra.mxu0 %v101
  %v657 = vpop.f32.mrf.mxu0
  %v658 = vadd.f32 0.0, %v657
  %v659 = vpop.f32.mrf.mxu0
  %v660 = vpop.f32.mrf.mxu0
  %v661 = vpop.f32.mrf.mxu0
  %662 = vdwg.mxu0
  %v664 = vsel %vm103, %v96, 0
  %666 = vmatprep.subr.bf16.mxu0 0
  %667 = vmatpush1.bf16.msra.mxu0 0
  %668 = vmatprep.subr.bf16.mxu0 0
  %669 = vmatpush1.bf16.msra.mxu0 0
  %670 = vmatprep.subr.bf16.mxu0 0
  %671 = vmatpush1.bf16.msra.mxu0 0
  %672 = vmatprep.subr.bf16.mxu0 0
  %673 = vmatpush1.bf16.msra.mxu0 0
  %674 = vmatprep.subr.bf16.mxu0 0
  %675 = vmatpush1.bf16.msra.mxu0 0
  %676 = vmatprep.subr.bf16.mxu0 0
  %677 = vmatpush1.bf16.msra.mxu0 0
  %678 = vmatprep.subr.bf16.mxu0 0
  %679 = vmatpush1.bf16.msra.mxu0 0
  %680 = vmatprep.subr.bf16.mxu0 0
  %681 = vmatpush1.bf16.msra.mxu0 %v664
  %682 = vmatprep.subr.bf16.mxu0 0
  %683 = vmatpush2.bf16.msra.mxu0 0
  %684 = vmatprep.subr.bf16.mxu0 0
  %685 = vmatpush2.bf16.msra.mxu0 0
  %686 = vmatprep.subr.bf16.mxu0 0
  %687 = vmatpush2.bf16.msra.mxu0 0
  %688 = vmatprep.subr.bf16.mxu0 0
  %689 = vmatpush2.bf16.msra.mxu0 0
  %690 = vmatprep.subr.bf16.mxu0 0
  %691 = vmatpush2.bf16.msra.mxu0 0
  %692 = vmatprep.subr.bf16.mxu0 0
  %693 = vmatpush2.bf16.msra.mxu0 0
  %694 = vmatprep.subr.bf16.mxu0 0
  %695 = vmatpush2.bf16.msra.mxu0 0
  %696 = vmatprep.subr.bf16.mxu0 0
  %697 = vmatpush2.bf16.msra.mxu0 0
  %698 = vmatprep.mubr.bf16.mxu0 0
  %699 = vmatmul.mubr.bf16.gmra.mxu0 %v101
  %v700 = vpop.f32.mrf.mxu0
  %v701 = vadd.f32 0.0, %v700
  %v702 = vpop.f32.mrf.mxu0
  %v703 = vpop.f32.mrf.mxu0
  %v704 = vpop.f32.mrf.mxu0
  %705 = vdwg.mxu0
  %v707 = vsel %vm103, %v97, 0
  %709 = vmatprep.subr.bf16.mxu0 0
  %710 = vmatpush1.bf16.msra.mxu0 0
  %711 = vmatprep.subr.bf16.mxu0 0
  %712 = vmatpush1.bf16.msra.mxu0 0
  %713 = vmatprep.subr.bf16.mxu0 0
  %714 = vmatpush1.bf16.msra.mxu0 0
  %715 = vmatprep.subr.bf16.mxu0 0
  %716 = vmatpush1.bf16.msra.mxu0 0
  %717 = vmatprep.subr.bf16.mxu0 0
  %718 = vmatpush1.bf16.msra.mxu0 0
  %719 = vmatprep.subr.bf16.mxu0 0
  %720 = vmatpush1.bf16.msra.mxu0 0
  %721 = vmatprep.subr.bf16.mxu0 0
  %722 = vmatpush1.bf16.msra.mxu0 0
  %723 = vmatprep.subr.bf16.mxu0 0
  %724 = vmatpush1.bf16.msra.mxu0 %v707
  %725 = vmatprep.subr.bf16.mxu0 0
  %726 = vmatpush2.bf16.msra.mxu0 0
  %727 = vmatprep.subr.bf16.mxu0 0
  %728 = vmatpush2.bf16.msra.mxu0 0
  %729 = vmatprep.subr.bf16.mxu0 0
  %730 = vmatpush2.bf16.msra.mxu0 0
  %731 = vmatprep.subr.bf16.mxu0 0
  %732 = vmatpush2.bf16.msra.mxu0 0
  %733 = vmatprep.subr.bf16.mxu0 0
  %734 = vmatpush2.bf16.msra.mxu0 0
  %735 = vmatprep.subr.bf16.mxu0 0
  %736 = vmatpush2.bf16.msra.mxu0 0
  %737 = vmatprep.subr.bf16.mxu0 0
  %738 = vmatpush2.bf16.msra.mxu0 0
  %739 = vmatprep.subr.bf16.mxu0 0
  %740 = vmatpush2.bf16.msra.mxu0 0
  %741 = vmatprep.mubr.bf16.mxu0 0
  %742 = vmatmul.mubr.bf16.gmra.mxu0 %v101
  %v743 = vpop.f32.mrf.mxu0
  %v744 = vadd.f32 0.0, %v743
  %v745 = vpop.f32.mrf.mxu0
  %v746 = vpop.f32.mrf.mxu0
  %v747 = vpop.f32.mrf.mxu0
  %748 = vdwg.mxu0
  %v750 = vsel %vm103, %v98, 0
  %752 = vmatprep.subr.bf16.mxu0 0
  %753 = vmatpush1.bf16.msra.mxu0 0
  %754 = vmatprep.subr.bf16.mxu0 0
  %755 = vmatpush1.bf16.msra.mxu0 0
  %756 = vmatprep.subr.bf16.mxu0 0
  %757 = vmatpush1.bf16.msra.mxu0 0
  %758 = vmatprep.subr.bf16.mxu0 0
  %759 = vmatpush1.bf16.msra.mxu0 0
  %760 = vmatprep.subr.bf16.mxu0 0
  %761 = vmatpush1.bf16.msra.mxu0 0
  %762 = vmatprep.subr.bf16.mxu0 0
  %763 = vmatpush1.bf16.msra.mxu0 0
  %764 = vmatprep.subr.bf16.mxu0 0
  %765 = vmatpush1.bf16.msra.mxu0 0
  %766 = vmatprep.subr.bf16.mxu0 0
  %767 = vmatpush1.bf16.msra.mxu0 %v750
  %768 = vmatprep.subr.bf16.mxu0 0
  %769 = vmatpush2.bf16.msra.mxu0 0
  %770 = vmatprep.subr.bf16.mxu0 0
  %771 = vmatpush2.bf16.msra.mxu0 0
  %772 = vmatprep.subr.bf16.mxu0 0
  %773 = vmatpush2.bf16.msra.mxu0 0
  %774 = vmatprep.subr.bf16.mxu0 0
  %775 = vmatpush2.bf16.msra.mxu0 0
  %776 = vmatprep.subr.bf16.mxu0 0
  %777 = vmatpush2.bf16.msra.mxu0 0
  %778 = vmatprep.subr.bf16.mxu0 0
  %779 = vmatpush2.bf16.msra.mxu0 0
  %780 = vmatprep.subr.bf16.mxu0 0
  %781 = vmatpush2.bf16.msra.mxu0 0
  %782 = vmatprep.subr.bf16.mxu0 0
  %783 = vmatpush2.bf16.msra.mxu0 0
  %784 = vmatprep.mubr.bf16.mxu0 0
  %785 = vmatmul.mubr.bf16.gmra.mxu0 %v101
  %v786 = vpop.f32.mrf.mxu0
  %v787 = vadd.f32 0.0, %v786
  %v788 = vpop.f32.mrf.mxu0
  %v789 = vpop.f32.mrf.mxu0
  %v790 = vpop.f32.mrf.mxu0
  %791 = vdwg.mxu0
  %793 = vset.pattern.permute.xlu0 0
  %794 = vperm.xlu0 %793, %v35
  %v795 = vpop.permute.xlu0 %794
  %798 = vset.pattern.permute.xlu0 0
  %799 = vperm.xlu0 %798, %v36
  %v800 = vpop.permute.xlu0 %799
  %803 = vset.pattern.permute.xlu0 0
  %804 = vperm.xlu0 %803, %v37
  %v805 = vpop.permute.xlu0 %804
  %808 = vset.pattern.permute.xlu0 0
  %809 = vperm.xlu0 %808, %v38
  %v810 = vpop.permute.xlu0 %809
  %813 = vset.pattern.permute.xlu0 0
  %814 = vperm.xlu0 %813, %v39
  %v815 = vpop.permute.xlu0 %814
  %818 = vset.pattern.permute.xlu0 0
  %819 = vperm.xlu0 %818, %v40
  %v820 = vpop.permute.xlu0 %819
  %823 = vset.pattern.permute.xlu0 0
  %824 = vperm.xlu0 %823, %v41
  %v825 = vpop.permute.xlu0 %824
  %828 = vset.pattern.permute.xlu0 0
  %829 = vperm.xlu0 %828, %v42
  %v830 = vpop.permute.xlu0 %829
  %833 = vset.pattern.permute.xlu0 0
  %834 = vperm.xlu0 %833, %v43
  %v835 = vpop.permute.xlu0 %834
  %838 = vset.pattern.permute.xlu0 0
  %839 = vperm.xlu0 %838, %v44
  %v840 = vpop.permute.xlu0 %839
  %843 = vset.pattern.permute.xlu0 0
  %844 = vperm.xlu0 %843, %v45
  %v845 = vpop.permute.xlu0 %844
  %848 = vset.pattern.permute.xlu0 0
  %849 = vperm.xlu0 %848, %v46
  %v850 = vpop.permute.xlu0 %849
  %853 = vset.pattern.permute.xlu0 0
  %854 = vperm.xlu0 %853, %v47
  %v855 = vpop.permute.xlu0 %854
  %858 = vset.pattern.permute.xlu0 0
  %859 = vperm.xlu0 %858, %v48
  %v860 = vpop.permute.xlu0 %859
  %863 = vset.pattern.permute.xlu0 0
  %864 = vperm.xlu0 %863, %v49
  %v865 = vpop.permute.xlu0 %864
  %868 = vset.pattern.permute.xlu0 0
  %869 = vperm.xlu0 %868, %v50
  %v870 = vpop.permute.xlu0 %869
  %v872 = vlaneseq
  %v873 = vshrl.u32 %v872, 7
  %v874 = vsub.s32 0, %v873
  %v875 = vrot.slane %v33, %v874
  %v876 = vmul.f32 %v795, %v875
  %v877 = vmul.f32 %v800, %v875
  %v878 = vmul.f32 %v805, %v875
  %v879 = vmul.f32 %v810, %v875
  %v880 = vmul.f32 %v815, %v875
  %v881 = vmul.f32 %v820, %v875
  %v882 = vmul.f32 %v825, %v875
  %v883 = vmul.f32 %v830, %v875
  %v884 = vmul.f32 %v835, %v875
  %v885 = vmul.f32 %v840, %v875
  %v886 = vmul.f32 %v845, %v875
  %v887 = vmul.f32 %v850, %v875
  %v888 = vmul.f32 %v855, %v875
  %v889 = vmul.f32 %v860, %v875
  %v890 = vmul.f32 %v865, %v875
  %v891 = vmul.f32 %v870, %v875
  %893 = vset.pattern.permute.xlu0 0
  %894 = vperm.xlu0 %893, %v142
  %v895 = vpop.permute.xlu0 %894
  %898 = vset.pattern.permute.xlu0 0
  %899 = vperm.xlu0 %898, %v185
  %v900 = vpop.permute.xlu0 %899
  %903 = vset.pattern.permute.xlu0 0
  %904 = vperm.xlu0 %903, %v228
  %v905 = vpop.permute.xlu0 %904
  %908 = vset.pattern.permute.xlu0 0
  %909 = vperm.xlu0 %908, %v271
  %v910 = vpop.permute.xlu0 %909
  %913 = vset.pattern.permute.xlu0 0
  %914 = vperm.xlu0 %913, %v314
  %v915 = vpop.permute.xlu0 %914
  %918 = vset.pattern.permute.xlu0 0
  %919 = vperm.xlu0 %918, %v357
  %v920 = vpop.permute.xlu0 %919
  %923 = vset.pattern.permute.xlu0 0
  %924 = vperm.xlu0 %923, %v400
  %v925 = vpop.permute.xlu0 %924
  %928 = vset.pattern.permute.xlu0 0
  %929 = vperm.xlu0 %928, %v443
  %v930 = vpop.permute.xlu0 %929
  %933 = vset.pattern.permute.xlu0 0
  %934 = vperm.xlu0 %933, %v486
  %v935 = vpop.permute.xlu0 %934
  %938 = vset.pattern.permute.xlu0 0
  %939 = vperm.xlu0 %938, %v529
  %v940 = vpop.permute.xlu0 %939
  %943 = vset.pattern.permute.xlu0 0
  %944 = vperm.xlu0 %943, %v572
  %v945 = vpop.permute.xlu0 %944
  %948 = vset.pattern.permute.xlu0 0
  %949 = vperm.xlu0 %948, %v615
  %v950 = vpop.permute.xlu0 %949
  %953 = vset.pattern.permute.xlu0 0
  %954 = vperm.xlu0 %953, %v658
  %v955 = vpop.permute.xlu0 %954
  %958 = vset.pattern.permute.xlu0 0
  %959 = vperm.xlu0 %958, %v701
  %v960 = vpop.permute.xlu0 %959
  %963 = vset.pattern.permute.xlu0 0
  %964 = vperm.xlu0 %963, %v744
  %v965 = vpop.permute.xlu0 %964
  %968 = vset.pattern.permute.xlu0 0
  %969 = vperm.xlu0 %968, %v787
  %v970 = vpop.permute.xlu0 %969
  %v972 = vlaneseq
  %v973 = vshrl.u32 %v972, 7
  %v974 = vsub.s32 1, %v973
  %v975 = vrot.slane %v33, %v974
  %v976 = vmul.f32 %v895, %v975
  %v977 = vmul.f32 %v900, %v975
  %v978 = vmul.f32 %v905, %v975
  %v979 = vmul.f32 %v910, %v975
  %v980 = vmul.f32 %v915, %v975
  %v981 = vmul.f32 %v920, %v975
  %v982 = vmul.f32 %v925, %v975
  %v983 = vmul.f32 %v930, %v975
  %v984 = vmul.f32 %v935, %v975
  %v985 = vmul.f32 %v940, %v975
  %v986 = vmul.f32 %v945, %v975
  %v987 = vmul.f32 %v950, %v975
  %v988 = vmul.f32 %v955, %v975
  %v989 = vmul.f32 %v960, %v975
  %v990 = vmul.f32 %v965, %v975
  %v991 = vmul.f32 %v970, %v975
  %v992 = vadd.f32 %v876, %v976
  %v993 = vadd.f32 %v877, %v977
  %v994 = vadd.f32 %v878, %v978
  %v995 = vadd.f32 %v879, %v979
  %v996 = vadd.f32 %v880, %v980
  %v997 = vadd.f32 %v881, %v981
  %v998 = vadd.f32 %v882, %v982
  %v999 = vadd.f32 %v883, %v983
  %v1000 = vadd.f32 %v884, %v984
  %v1001 = vadd.f32 %v885, %v985
  %v1002 = vadd.f32 %v886, %v986
  %v1003 = vadd.f32 %v887, %v987
  %v1004 = vadd.f32 %v888, %v988
  %v1005 = vadd.f32 %v889, %v989
  %v1006 = vadd.f32 %v890, %v990
  %v1007 = vadd.f32 %v891, %v991
  %v1008 = vlaneseq
  %v1009 = vshrl.u32 %v1008, 7
  %v1010 = vsub.s32 2, %v1009
  %v1011 = vrot.slane %v33, %v1010
  %v1012 = vadd.f32 %v992, %v1011
  %v1013 = vadd.f32 %v993, %v1011
  %v1014 = vadd.f32 %v994, %v1011
  %v1015 = vadd.f32 %v995, %v1011
  %v1016 = vadd.f32 %v996, %v1011
  %v1017 = vadd.f32 %v997, %v1011
  %v1018 = vadd.f32 %v998, %v1011
  %v1019 = vadd.f32 %v999, %v1011
  %v1020 = vadd.f32 %v1000, %v1011
  %v1021 = vadd.f32 %v1001, %v1011
  %v1022 = vadd.f32 %v1002, %v1011
  %v1023 = vadd.f32 %v1003, %v1011
  %v1024 = vadd.f32 %v1004, %v1011
  %v1025 = vadd.f32 %v1005, %v1011
  %v1026 = vadd.f32 %v1006, %v1011
  %v1027 = vadd.f32 %v1007, %v1011
  %v1028 = vmax.f32 %v1012, 0.0
  %v1029 = vmax.f32 %v1013, 0.0
  %v1030 = vmax.f32 %v1014, 0.0
  %v1031 = vmax.f32 %v1015, 0.0
  %v1032 = vmax.f32 %v1016, 0.0
  %v1033 = vmax.f32 %v1017, 0.0
  %v1034 = vmax.f32 %v1018, 0.0
  %v1035 = vmax.f32 %v1019, 0.0
  %v1036 = vmax.f32 %v1020, 0.0
  %v1037 = vmax.f32 %v1021, 0.0
  %v1038 = vmax.f32 %v1022, 0.0
  %v1039 = vmax.f32 %v1023, 0.0
  %v1040 = vmax.f32 %v1024, 0.0
  %v1041 = vmax.f32 %v1025, 0.0
  %v1042 = vmax.f32 %v1026, 0.0
  %v1043 = vmax.f32 %v1027, 0.0
  %v1044 = vpack.c.bf16 %v1029, %v1028
  %v1045 = vpack.c.bf16 %v1031, %v1030
  %v1046 = vpack.c.bf16 %v1033, %v1032
  %v1047 = vpack.c.bf16 %v1035, %v1034
  %v1048 = vpack.c.bf16 %v1037, %v1036
  %v1049 = vpack.c.bf16 %v1039, %v1038
  %v1050 = vpack.c.bf16 %v1041, %v1040
  %v1051 = vpack.c.bf16 %v1043, %v1042
  %v1052 = vld [vmem:[%s2] sm:$0xf]
  %v1053 = vld [vmem:[%s2 + $0x4] sm:$0xf]
  %v1054 = vlaneseq
  %v1055 = vshrl.u32 %v1054, 7
  %v1056 = vsub.s32 3, %v1055
  %v1057 = vrot.slane %v33, %v1056
  %v1060 = vunpack.c.l.b16 %v1052
  %v1061 = vunpack.c.l.b16 %v1053
  %v1062 = vpack.c.b16 %v1061, %v1060
  %vm1064 = vcmask 130048
  %v1066 = vsel %vm1064, %v1044, 0
  %v1069 = vsel %vm1064, %v1045, 0
  %v1072 = vsel %vm1064, %v1046, 0
  %v1075 = vsel %vm1064, %v1047, 0
  %v1078 = vsel %vm1064, %v1048, 0
  %v1081 = vsel %vm1064, %v1049, 0
  %v1084 = vsel %vm1064, %v1050, 0
  %v1087 = vsel %vm1064, %v1051, 0
  %1089 = vmatprep.subr.bf16.mxu0 0
  %1090 = vmatpush1.bf16.msra.mxu0 0
  %1091 = vmatprep.subr.bf16.mxu0 0
  %1092 = vmatpush1.bf16.msra.mxu0 0
  %1093 = vmatprep.subr.bf16.mxu0 0
  %1094 = vmatpush1.bf16.msra.mxu0 0
  %1095 = vmatprep.subr.bf16.mxu0 0
  %1096 = vmatpush1.bf16.msra.mxu0 0
  %1097 = vmatprep.subr.bf16.mxu0 0
  %1098 = vmatpush1.bf16.msra.mxu0 0
  %1099 = vmatprep.subr.bf16.mxu0 0
  %1100 = vmatpush1.bf16.msra.mxu0 0
  %1101 = vmatprep.subr.bf16.mxu0 0
  %1102 = vmatpush1.bf16.msra.mxu0 0
  %1103 = vmatprep.subr.bf16.mxu0 0
  %1104 = vmatpush1.bf16.msra.mxu0 %v1062
  %1105 = vmatprep.subr.bf16.mxu0 0
  %1106 = vmatpush2.bf16.msra.mxu0 0
  %1107 = vmatprep.subr.bf16.mxu0 0
  %1108 = vmatpush2.bf16.msra.mxu0 0
  %1109 = vmatprep.subr.bf16.mxu0 0
  %1110 = vmatpush2.bf16.msra.mxu0 0
  %1111 = vmatprep.subr.bf16.mxu0 0
  %1112 = vmatpush2.bf16.msra.mxu0 0
  %1113 = vmatprep.subr.bf16.mxu0 0
  %1114 = vmatpush2.bf16.msra.mxu0 0
  %1115 = vmatprep.subr.bf16.mxu0 0
  %1116 = vmatpush2.bf16.msra.mxu0 0
  %1117 = vmatprep.subr.bf16.mxu0 0
  %1118 = vmatpush2.bf16.msra.mxu0 0
  %1119 = vmatprep.subr.bf16.mxu0 0
  %1120 = vmatpush2.bf16.msra.mxu0 0
  %1121 = vmatprep.mubr.bf16.mxu0 0
  %1122 = vmatmul.mubr.bf16.gmra.mxu0 %v1066
  %v1123 = vpop.f32.mrf.mxu0
  %v1124 = vadd.f32 %v1057, %v1123
  %v1125 = vpop.f32.mrf.mxu0
  %v1126 = vpop.f32.mrf.mxu0
  %v1127 = vadd.f32 %v1057, %v1126
  %v1128 = vpop.f32.mrf.mxu0
  %1129 = vmatprep.mubr.bf16.mxu0 0
  %1130 = vmatmul.mubr.bf16.gmra.mxu0 %v1069
  %v1131 = vpop.f32.mrf.mxu0
  %v1132 = vadd.f32 %v1057, %v1131
  %v1133 = vpop.f32.mrf.mxu0
  %v1134 = vpop.f32.mrf.mxu0
  %v1135 = vadd.f32 %v1057, %v1134
  %v1136 = vpop.f32.mrf.mxu0
  %1137 = vmatprep.mubr.bf16.mxu0 0
  %1138 = vmatmul.mubr.bf16.gmra.mxu0 %v1072
  %v1139 = vpop.f32.mrf.mxu0
  %v1140 = vadd.f32 %v1057, %v1139
  %v1141 = vpop.f32.mrf.mxu0
  %v1142 = vpop.f32.mrf.mxu0
  %v1143 = vadd.f32 %v1057, %v1142
  %v1144 = vpop.f32.mrf.mxu0
  %1145 = vmatprep.mubr.bf16.mxu0 0
  %1146 = vmatmul.mubr.bf16.gmra.mxu0 %v1075
  %v1147 = vpop.f32.mrf.mxu0
  %v1148 = vadd.f32 %v1057, %v1147
  %v1149 = vpop.f32.mrf.mxu0
  %v1150 = vpop.f32.mrf.mxu0
  %v1151 = vadd.f32 %v1057, %v1150
  %v1152 = vpop.f32.mrf.mxu0
  %1153 = vmatprep.mubr.bf16.mxu0 0
  %1154 = vmatmul.mubr.bf16.gmra.mxu0 %v1078
  %v1155 = vpop.f32.mrf.mxu0
  %v1156 = vadd.f32 %v1057, %v1155
  %v1157 = vpop.f32.mrf.mxu0
  %v1158 = vpop.f32.mrf.mxu0
  %v1159 = vadd.f32 %v1057, %v1158
  %v1160 = vpop.f32.mrf.mxu0
  %1161 = vmatprep.mubr.bf16.mxu0 0
  %1162 = vmatmul.mubr.bf16.gmra.mxu0 %v1081
  %v1163 = vpop.f32.mrf.mxu0
  %v1164 = vadd.f32 %v1057, %v1163
  %v1165 = vpop.f32.mrf.mxu0
  %v1166 = vpop.f32.mrf.mxu0
  %v1167 = vadd.f32 %v1057, %v1166
  %v1168 = vpop.f32.mrf.mxu0
  %1169 = vmatprep.mubr.bf16.mxu0 0
  %1170 = vmatmul.mubr.bf16.gmra.mxu0 %v1084
  %v1171 = vpop.f32.mrf.mxu0
  %v1172 = vadd.f32 %v1057, %v1171
  %v1173 = vpop.f32.mrf.mxu0
  %v1174 = vpop.f32.mrf.mxu0
  %v1175 = vadd.f32 %v1057, %v1174
  %v1176 = vpop.f32.mrf.mxu0
  %1177 = vmatprep.mubr.bf16.mxu0 0
  %1178 = vmatmul.mubr.bf16.gmra.mxu0 %v1087
  %v1179 = vpop.f32.mrf.mxu0
  %v1180 = vadd.f32 %v1057, %v1179
  %v1181 = vpop.f32.mrf.mxu0
  %v1182 = vpop.f32.mrf.mxu0
  %v1183 = vadd.f32 %v1057, %v1182
  %v1184 = vpop.f32.mrf.mxu0
  %1185 = vdwg.mxu0
  %v1186 = vmax.f32 %v1124, 0.0
  %v1187 = vmax.f32 %v1127, 0.0
  %v1188 = vmax.f32 %v1132, 0.0
  %v1189 = vmax.f32 %v1135, 0.0
  %v1190 = vmax.f32 %v1140, 0.0
  %v1191 = vmax.f32 %v1143, 0.0
  %v1192 = vmax.f32 %v1148, 0.0
  %v1193 = vmax.f32 %v1151, 0.0
  %v1194 = vmax.f32 %v1156, 0.0
  %v1195 = vmax.f32 %v1159, 0.0
  %v1196 = vmax.f32 %v1164, 0.0
  %v1197 = vmax.f32 %v1167, 0.0
  %v1198 = vmax.f32 %v1172, 0.0
  %v1199 = vmax.f32 %v1175, 0.0
  %v1200 = vmax.f32 %v1180, 0.0
  %v1201 = vmax.f32 %v1183, 0.0
  %v1202 = vpack.c.bf16 %v1187, %v1186
  %v1203 = vpack.c.bf16 %v1189, %v1188
  %v1204 = vpack.c.bf16 %v1191, %v1190
  %v1205 = vpack.c.bf16 %v1193, %v1192
  %v1206 = vpack.c.bf16 %v1195, %v1194
  %v1207 = vpack.c.bf16 %v1197, %v1196
  %v1208 = vpack.c.bf16 %v1199, %v1198
  %v1209 = vpack.c.bf16 %v1201, %v1200
  %v1210 = vld [vmem:[%s3] sm:$0xf]
  %v1211 = vld [vmem:[%s3 + $0x4] sm:$0xf]
  %v1212 = vld [vmem:[%s3 + $0x8] sm:$0xf]
  %v1213 = vld [vmem:[%s3 + $0xc] sm:$0xf]
  %v1214 = vlaneseq
  %v1215 = vshrl.u32 %v1214, 7
  %v1216 = vsub.s32 4, %v1215
  %v1217 = vrot.slane %v33, %v1216
  %v1222 = vunpack.c.l.b16 %v1210
  %v1223 = vunpack.c.l.b16 %v1211
  %v1224 = vunpack.c.l.b16 %v1212
  %v1225 = vunpack.c.l.b16 %v1213
  %v1226 = vpack.c.b16 %v1223, %v1222
  %v1227 = vpack.c.b16 %v1225, %v1224
  %vm1230 = vcmask 261120
  %v1232 = vsel %vm1230, %v1202, 0
  %v1235 = vsel %vm1230, %v1203, 0
  %v1238 = vsel %vm1230, %v1204, 0
  %v1241 = vsel %vm1230, %v1205, 0
  %v1244 = vsel %vm1230, %v1206, 0
  %v1247 = vsel %vm1230, %v1207, 0
  %v1250 = vsel %vm1230, %v1208, 0
  %v1253 = vsel %vm1230, %v1209, 0
  %1255 = vmatprep.subr.bf16.mxu0 0
  %1256 = vmatpush1.bf16.msra.mxu0 0
  %1257 = vmatprep.subr.bf16.mxu0 0
  %1258 = vmatpush1.bf16.msra.mxu0 0
  %1259 = vmatprep.subr.bf16.mxu0 0
  %1260 = vmatpush1.bf16.msra.mxu0 0
  %1261 = vmatprep.subr.bf16.mxu0 0
  %1262 = vmatpush1.bf16.msra.mxu0 0
  %1263 = vmatprep.subr.bf16.mxu0 0
  %1264 = vmatpush1.bf16.msra.mxu0 0
  %1265 = vmatprep.subr.bf16.mxu0 0
  %1266 = vmatpush1.bf16.msra.mxu0 0
  %1267 = vmatprep.subr.bf16.mxu0 0
  %1268 = vmatpush1.bf16.msra.mxu0 %v1227
  %1269 = vmatprep.subr.bf16.mxu0 0
  %1270 = vmatpush1.bf16.msra.mxu0 %v1226
  %1271 = vmatprep.subr.bf16.mxu0 0
  %1272 = vmatpush2.bf16.msra.mxu0 0
  %1273 = vmatprep.subr.bf16.mxu0 0
  %1274 = vmatpush2.bf16.msra.mxu0 0
  %1275 = vmatprep.subr.bf16.mxu0 0
  %1276 = vmatpush2.bf16.msra.mxu0 0
  %1277 = vmatprep.subr.bf16.mxu0 0
  %1278 = vmatpush2.bf16.msra.mxu0 0
  %1279 = vmatprep.subr.bf16.mxu0 0
  %1280 = vmatpush2.bf16.msra.mxu0 0
  %1281 = vmatprep.subr.bf16.mxu0 0
  %1282 = vmatpush2.bf16.msra.mxu0 0
  %1283 = vmatprep.subr.bf16.mxu0 0
  %1284 = vmatpush2.bf16.msra.mxu0 0
  %1285 = vmatprep.subr.bf16.mxu0 0
  %1286 = vmatpush2.bf16.msra.mxu0 0
  %1287 = vmatprep.mubr.bf16.mxu0 0
  %1288 = vmatmul.mubr.bf16.gmra.mxu0 %v1232
  %v1289 = vpop.f32.mrf.mxu0
  %v1290 = vadd.f32 %v1217, %v1289
  %v1291 = vpop.f32.mrf.mxu0
  %v1292 = vpop.f32.mrf.mxu0
  %v1293 = vadd.f32 %v1217, %v1292
  %v1294 = vpop.f32.mrf.mxu0
  %1295 = vmatprep.mubr.bf16.mxu0 0
  %1296 = vmatmul.mubr.bf16.gmra.mxu0 %v1235
  %v1297 = vpop.f32.mrf.mxu0
  %v1298 = vadd.f32 %v1217, %v1297
  %v1299 = vpop.f32.mrf.mxu0
  %v1300 = vpop.f32.mrf.mxu0
  %v1301 = vadd.f32 %v1217, %v1300
  %v1302 = vpop.f32.mrf.mxu0
  %1303 = vmatprep.mubr.bf16.mxu0 0
  %1304 = vmatmul.mubr.bf16.gmra.mxu0 %v1238
  %v1305 = vpop.f32.mrf.mxu0
  %v1306 = vadd.f32 %v1217, %v1305
  %v1307 = vpop.f32.mrf.mxu0
  %v1308 = vpop.f32.mrf.mxu0
  %v1309 = vadd.f32 %v1217, %v1308
  %v1310 = vpop.f32.mrf.mxu0
  %1311 = vmatprep.mubr.bf16.mxu0 0
  %1312 = vmatmul.mubr.bf16.gmra.mxu0 %v1241
  %v1313 = vpop.f32.mrf.mxu0
  %v1314 = vadd.f32 %v1217, %v1313
  %v1315 = vpop.f32.mrf.mxu0
  %v1316 = vpop.f32.mrf.mxu0
  %v1317 = vadd.f32 %v1217, %v1316
  %v1318 = vpop.f32.mrf.mxu0
  %1319 = vmatprep.mubr.bf16.mxu0 0
  %1320 = vmatmul.mubr.bf16.gmra.mxu0 %v1244
  %v1321 = vpop.f32.mrf.mxu0
  %v1322 = vadd.f32 %v1217, %v1321
  %v1323 = vpop.f32.mrf.mxu0
  %v1324 = vpop.f32.mrf.mxu0
  %v1325 = vadd.f32 %v1217, %v1324
  %v1326 = vpop.f32.mrf.mxu0
  %1327 = vmatprep.mubr.bf16.mxu0 0
  %1328 = vmatmul.mubr.bf16.gmra.mxu0 %v1247
  %v1329 = vpop.f32.mrf.mxu0
  %v1330 = vadd.f32 %v1217, %v1329
  %v1331 = vpop.f32.mrf.mxu0
  %v1332 = vpop.f32.mrf.mxu0
  %v1333 = vadd.f32 %v1217, %v1332
  %v1334 = vpop.f32.mrf.mxu0
  %1335 = vmatprep.mubr.bf16.mxu0 0
  %1336 = vmatmul.mubr.bf16.gmra.mxu0 %v1250
  %v1337 = vpop.f32.mrf.mxu0
  %v1338 = vadd.f32 %v1217, %v1337
  %v1339 = vpop.f32.mrf.mxu0
  %v1340 = vpop.f32.mrf.mxu0
  %v1341 = vadd.f32 %v1217, %v1340
  %v1342 = vpop.f32.mrf.mxu0
  %1343 = vmatprep.mubr.bf16.mxu0 0
  %1344 = vmatmul.mubr.bf16.gmra.mxu0 %v1253
  %v1345 = vpop.f32.mrf.mxu0
  %v1346 = vadd.f32 %v1217, %v1345
  %v1347 = vpop.f32.mrf.mxu0
  %v1348 = vpop.f32.mrf.mxu0
  %v1349 = vadd.f32 %v1217, %v1348
  %v1350 = vpop.f32.mrf.mxu0
  %1351 = vdwg.mxu0
  %v1352 = vpack.c.bf16 %v1293, %v1290
  %v1353 = vpack.c.bf16 %v1301, %v1298
  %v1354 = vpack.c.bf16 %v1309, %v1306
  %v1355 = vpack.c.bf16 %v1317, %v1314
  %v1356 = vpack.c.bf16 %v1325, %v1322
  %v1357 = vpack.c.bf16 %v1333, %v1330
  %v1358 = vpack.c.bf16 %v1341, %v1338
  %v1359 = vpack.c.bf16 %v1349, %v1346
  %v1368 = vunpack.c.l.b16 %v1352
  %v1369 = vunpack.c.h.b16 %v1352
  %v1370 = vunpack.c.l.b16 %v1353
  %v1371 = vunpack.c.h.b16 %v1353
  %v1372 = vunpack.c.l.b16 %v1354
  %v1373 = vunpack.c.h.b16 %v1354
  %v1374 = vunpack.c.l.b16 %v1355
  %v1375 = vunpack.c.h.b16 %v1355
  %v1376 = vunpack.c.l.b16 %v1356
  %v1377 = vunpack.c.h.b16 %v1356
  %v1378 = vunpack.c.l.b16 %v1357
  %v1379 = vunpack.c.h.b16 %v1357
  %v1380 = vunpack.c.l.b16 %v1358
  %v1381 = vunpack.c.h.b16 %v1358
  %v1382 = vunpack.c.l.b16 %v1359
  %v1383 = vunpack.c.h.b16 %v1359
  %v1384 = vpack.c.b16 %v1368, %v1368
  %v1385 = vpack.c.b16 %v1369, %v1369
  %v1386 = vpack.c.b16 %v1370, %v1370
  %v1387 = vpack.c.b16 %v1371, %v1371
  %v1388 = vpack.c.b16 %v1372, %v1372
  %v1389 = vpack.c.b16 %v1373, %v1373
  %v1390 = vpack.c.b16 %v1374, %v1374
  %v1391 = vpack.c.b16 %v1375, %v1375
  %v1392 = vpack.c.b16 %v1376, %v1376
  %v1393 = vpack.c.b16 %v1377, %v1377
  %v1394 = vpack.c.b16 %v1378, %v1378
  %v1395 = vpack.c.b16 %v1379, %v1379
  %v1396 = vpack.c.b16 %v1380, %v1380
  %v1397 = vpack.c.b16 %v1381, %v1381
  %v1398 = vpack.c.b16 %v1382, %v1382
  %v1399 = vpack.c.b16 %v1383, %v1383
  %v1401 = vsel %vm103, %v1384, 0
  %1403 = vmatprep.subr.bf16.mxu0 0
  %1404 = vmatpush1.bf16.msra.mxu0 0
  %1405 = vmatprep.subr.bf16.mxu0 0
  %1406 = vmatpush1.bf16.msra.mxu0 0
  %1407 = vmatprep.subr.bf16.mxu0 0
  %1408 = vmatpush1.bf16.msra.mxu0 0
  %1409 = vmatprep.subr.bf16.mxu0 0
  %1410 = vmatpush1.bf16.msra.mxu0 0
  %1411 = vmatprep.subr.bf16.mxu0 0
  %1412 = vmatpush1.bf16.msra.mxu0 0
  %1413 = vmatprep.subr.bf16.mxu0 0
  %1414 = vmatpush1.bf16.msra.mxu0 0
  %1415 = vmatprep.subr.bf16.mxu0 0
  %1416 = vmatpush1.bf16.msra.mxu0 0
  %1417 = vmatprep.subr.bf16.mxu0 0
  %1418 = vmatpush1.bf16.msra.mxu0 %v1401
  %1419 = vmatprep.subr.bf16.mxu0 0
  %1420 = vmatpush2.bf16.msra.mxu0 0
  %1421 = vmatprep.subr.bf16.mxu0 0
  %1422 = vmatpush2.bf16.msra.mxu0 0
  %1423 = vmatprep.subr.bf16.mxu0 0
  %1424 = vmatpush2.bf16.msra.mxu0 0
  %1425 = vmatprep.subr.bf16.mxu0 0
  %1426 = vmatpush2.bf16.msra.mxu0 0
  %1427 = vmatprep.subr.bf16.mxu0 0
  %1428 = vmatpush2.bf16.msra.mxu0 0
  %1429 = vmatprep.subr.bf16.mxu0 0
  %1430 = vmatpush2.bf16.msra.mxu0 0
  %1431 = vmatprep.subr.bf16.mxu0 0
  %1432 = vmatpush2.bf16.msra.mxu0 0
  %1433 = vmatprep.subr.bf16.mxu0 0
  %1434 = vmatpush2.bf16.msra.mxu0 0
  %1435 = vmatprep.mubr.bf16.mxu0 0
  %1436 = vmatmul.mubr.bf16.gmra.mxu0 %v101
  %v1437 = vpop.f32.mrf.mxu0
  %v1438 = vadd.f32 0.0, %v1437
  %v1439 = vpop.f32.mrf.mxu0
  %v1440 = vpop.f32.mrf.mxu0
  %v1441 = vpop.f32.mrf.mxu0
  %1442 = vdwg.mxu0
  %v1444 = vsel %vm103, %v1385, 0
  %1446 = vmatprep.subr.bf16.mxu0 0
  %1447 = vmatpush1.bf16.msra.mxu0 0
  %1448 = vmatprep.subr.bf16.mxu0 0
  %1449 = vmatpush1.bf16.msra.mxu0 0
  %1450 = vmatprep.subr.bf16.mxu0 0
  %1451 = vmatpush1.bf16.msra.mxu0 0
  %1452 = vmatprep.subr.bf16.mxu0 0
  %1453 = vmatpush1.bf16.msra.mxu0 0
  %1454 = vmatprep.subr.bf16.mxu0 0
  %1455 = vmatpush1.bf16.msra.mxu0 0
  %1456 = vmatprep.subr.bf16.mxu0 0
  %1457 = vmatpush1.bf16.msra.mxu0 0
  %1458 = vmatprep.subr.bf16.mxu0 0
  %1459 = vmatpush1.bf16.msra.mxu0 0
  %1460 = vmatprep.subr.bf16.mxu0 0
  %1461 = vmatpush1.bf16.msra.mxu0 %v1444
  %1462 = vmatprep.subr.bf16.mxu0 0
  %1463 = vmatpush2.bf16.msra.mxu0 0
  %1464 = vmatprep.subr.bf16.mxu0 0
  %1465 = vmatpush2.bf16.msra.mxu0 0
  %1466 = vmatprep.subr.bf16.mxu0 0
  %1467 = vmatpush2.bf16.msra.mxu0 0
  %1468 = vmatprep.subr.bf16.mxu0 0
  %1469 = vmatpush2.bf16.msra.mxu0 0
  %1470 = vmatprep.subr.bf16.mxu0 0
  %1471 = vmatpush2.bf16.msra.mxu0 0
  %1472 = vmatprep.subr.bf16.mxu0 0
  %1473 = vmatpush2.bf16.msra.mxu0 0
  %1474 = vmatprep.subr.bf16.mxu0 0
  %1475 = vmatpush2.bf16.msra.mxu0 0
  %1476 = vmatprep.subr.bf16.mxu0 0
  %1477 = vmatpush2.bf16.msra.mxu0 0
  %1478 = vmatprep.mubr.bf16.mxu0 0
  %1479 = vmatmul.mubr.bf16.gmra.mxu0 %v101
  %v1480 = vpop.f32.mrf.mxu0
  %v1481 = vadd.f32 0.0, %v1480
  %v1482 = vpop.f32.mrf.mxu0
  %v1483 = vpop.f32.mrf.mxu0
  %v1484 = vpop.f32.mrf.mxu0
  %1485 = vdwg.mxu0
  %v1487 = vsel %vm103, %v1386, 0
  %1489 = vmatprep.subr.bf16.mxu0 0
  %1490 = vmatpush1.bf16.msra.mxu0 0
  %1491 = vmatprep.subr.bf16.mxu0 0
  %1492 = vmatpush1.bf16.msra.mxu0 0
  %1493 = vmatprep.subr.bf16.mxu0 0
  %1494 = vmatpush1.bf16.msra.mxu0 0
  %1495 = vmatprep.subr.bf16.mxu0 0
  %1496 = vmatpush1.bf16.msra.mxu0 0
  %1497 = vmatprep.subr.bf16.mxu0 0
  %1498 = vmatpush1.bf16.msra.mxu0 0
  %1499 = vmatprep.subr.bf16.mxu0 0
  %1500 = vmatpush1.bf16.msra.mxu0 0
  %1501 = vmatprep.subr.bf16.mxu0 0
  %1502 = vmatpush1.bf16.msra.mxu0 0
  %1503 = vmatprep.subr.bf16.mxu0 0
  %1504 = vmatpush1.bf16.msra.mxu0 %v1487
  %1505 = vmatprep.subr.bf16.mxu0 0
  %1506 = vmatpush2.bf16.msra.mxu0 0
  %1507 = vmatprep.subr.bf16.mxu0 0
  %1508 = vmatpush2.bf16.msra.mxu0 0
  %1509 = vmatprep.subr.bf16.mxu0 0
  %1510 = vmatpush2.bf16.msra.mxu0 0
  %1511 = vmatprep.subr.bf16.mxu0 0
  %1512 = vmatpush2.bf16.msra.mxu0 0
  %1513 = vmatprep.subr.bf16.mxu0 0
  %1514 = vmatpush2.bf16.msra.mxu0 0
  %1515 = vmatprep.subr.bf16.mxu0 0
  %1516 = vmatpush2.bf16.msra.mxu0 0
  %1517 = vmatprep.subr.bf16.mxu0 0
  %1518 = vmatpush2.bf16.msra.mxu0 0
  %1519 = vmatprep.subr.bf16.mxu0 0
  %1520 = vmatpush2.bf16.msra.mxu0 0
  %1521 = vmatprep.mubr.bf16.mxu0 0
  %1522 = vmatmul.mubr.bf16.gmra.mxu0 %v101
  %v1523 = vpop.f32.mrf.mxu0
  %v1524 = vadd.f32 0.0, %v1523
  %v1525 = vpop.f32.mrf.mxu0
  %v1526 = vpop.f32.mrf.mxu0
  %v1527 = vpop.f32.mrf.mxu0
  %1528 = vdwg.mxu0
  %v1530 = vsel %vm103, %v1387, 0
  %1532 = vmatprep.subr.bf16.mxu0 0
  %1533 = vmatpush1.bf16.msra.mxu0 0
  %1534 = vmatprep.subr.bf16.mxu0 0
  %1535 = vmatpush1.bf16.msra.mxu0 0
  %1536 = vmatprep.subr.bf16.mxu0 0
  %1537 = vmatpush1.bf16.msra.mxu0 0
  %1538 = vmatprep.subr.bf16.mxu0 0
  %1539 = vmatpush1.bf16.msra.mxu0 0
  %1540 = vmatprep.subr.bf16.mxu0 0
  %1541 = vmatpush1.bf16.msra.mxu0 0
  %1542 = vmatprep.subr.bf16.mxu0 0
  %1543 = vmatpush1.bf16.msra.mxu0 0
  %1544 = vmatprep.subr.bf16.mxu0 0
  %1545 = vmatpush1.bf16.msra.mxu0 0
  %1546 = vmatprep.subr.bf16.mxu0 0
  %1547 = vmatpush1.bf16.msra.mxu0 %v1530
  %1548 = vmatprep.subr.bf16.mxu0 0
  %1549 = vmatpush2.bf16.msra.mxu0 0
  %1550 = vmatprep.subr.bf16.mxu0 0
  %1551 = vmatpush2.bf16.msra.mxu0 0
  %1552 = vmatprep.subr.bf16.mxu0 0
  %1553 = vmatpush2.bf16.msra.mxu0 0
  %1554 = vmatprep.subr.bf16.mxu0 0
  %1555 = vmatpush2.bf16.msra.mxu0 0
  %1556 = vmatprep.subr.bf16.mxu0 0
  %1557 = vmatpush2.bf16.msra.mxu0 0
  %1558 = vmatprep.subr.bf16.mxu0 0
  %1559 = vmatpush2.bf16.msra.mxu0 0
  %1560 = vmatprep.subr.bf16.mxu0 0
  %1561 = vmatpush2.bf16.msra.mxu0 0
  %1562 = vmatprep.subr.bf16.mxu0 0
  %1563 = vmatpush2.bf16.msra.mxu0 0
  %1564 = vmatprep.mubr.bf16.mxu0 0
  %1565 = vmatmul.mubr.bf16.gmra.mxu0 %v101
  %v1566 = vpop.f32.mrf.mxu0
  %v1567 = vadd.f32 0.0, %v1566
  %v1568 = vpop.f32.mrf.mxu0
  %v1569 = vpop.f32.mrf.mxu0
  %v1570 = vpop.f32.mrf.mxu0
  %1571 = vdwg.mxu0
  %v1573 = vsel %vm103, %v1388, 0
  %1575 = vmatprep.subr.bf16.mxu0 0
  %1576 = vmatpush1.bf16.msra.mxu0 0
  %1577 = vmatprep.subr.bf16.mxu0 0
  %1578 = vmatpush1.bf16.msra.mxu0 0
  %1579 = vmatprep.subr.bf16.mxu0 0
  %1580 = vmatpush1.bf16.msra.mxu0 0
  %1581 = vmatprep.subr.bf16.mxu0 0
  %1582 = vmatpush1.bf16.msra.mxu0 0
  %1583 = vmatprep.subr.bf16.mxu0 0
  %1584 = vmatpush1.bf16.msra.mxu0 0
  %1585 = vmatprep.subr.bf16.mxu0 0
  %1586 = vmatpush1.bf16.msra.mxu0 0
  %1587 = vmatprep.subr.bf16.mxu0 0
  %1588 = vmatpush1.bf16.msra.mxu0 0
  %1589 = vmatprep.subr.bf16.mxu0 0
  %1590 = vmatpush1.bf16.msra.mxu0 %v1573
  %1591 = vmatprep.subr.bf16.mxu0 0
  %1592 = vmatpush2.bf16.msra.mxu0 0
  %1593 = vmatprep.subr.bf16.mxu0 0
  %1594 = vmatpush2.bf16.msra.mxu0 0
  %1595 = vmatprep.subr.bf16.mxu0 0
  %1596 = vmatpush2.bf16.msra.mxu0 0
  %1597 = vmatprep.subr.bf16.mxu0 0
  %1598 = vmatpush2.bf16.msra.mxu0 0
  %1599 = vmatprep.subr.bf16.mxu0 0
  %1600 = vmatpush2.bf16.msra.mxu0 0
  %1601 = vmatprep.subr.bf16.mxu0 0
  %1602 = vmatpush2.bf16.msra.mxu0 0
  %1603 = vmatprep.subr.bf16.mxu0 0
  %1604 = vmatpush2.bf16.msra.mxu0 0
  %1605 = vmatprep.subr.bf16.mxu0 0
  %1606 = vmatpush2.bf16.msra.mxu0 0
  %1607 = vmatprep.mubr.bf16.mxu0 0
  %1608 = vmatmul.mubr.bf16.gmra.mxu0 %v101
  %v1609 = vpop.f32.mrf.mxu0
  %v1610 = vadd.f32 0.0, %v1609
  %v1611 = vpop.f32.mrf.mxu0
  %v1612 = vpop.f32.mrf.mxu0
  %v1613 = vpop.f32.mrf.mxu0
  %1614 = vdwg.mxu0
  %v1616 = vsel %vm103, %v1389, 0
  %1618 = vmatprep.subr.bf16.mxu0 0
  %1619 = vmatpush1.bf16.msra.mxu0 0
  %1620 = vmatprep.subr.bf16.mxu0 0
  %1621 = vmatpush1.bf16.msra.mxu0 0
  %1622 = vmatprep.subr.bf16.mxu0 0
  %1623 = vmatpush1.bf16.msra.mxu0 0
  %1624 = vmatprep.subr.bf16.mxu0 0
  %1625 = vmatpush1.bf16.msra.mxu0 0
  %1626 = vmatprep.subr.bf16.mxu0 0
  %1627 = vmatpush1.bf16.msra.mxu0 0
  %1628 = vmatprep.subr.bf16.mxu0 0
  %1629 = vmatpush1.bf16.msra.mxu0 0
  %1630 = vmatprep.subr.bf16.mxu0 0
  %1631 = vmatpush1.bf16.msra.mxu0 0
  %1632 = vmatprep.subr.bf16.mxu0 0
  %1633 = vmatpush1.bf16.msra.mxu0 %v1616
  %1634 = vmatprep.subr.bf16.mxu0 0
  %1635 = vmatpush2.bf16.msra.mxu0 0
  %1636 = vmatprep.subr.bf16.mxu0 0
  %1637 = vmatpush2.bf16.msra.mxu0 0
  %1638 = vmatprep.subr.bf16.mxu0 0
  %1639 = vmatpush2.bf16.msra.mxu0 0
  %1640 = vmatprep.subr.bf16.mxu0 0
  %1641 = vmatpush2.bf16.msra.mxu0 0
  %1642 = vmatprep.subr.bf16.mxu0 0
  %1643 = vmatpush2.bf16.msra.mxu0 0
  %1644 = vmatprep.subr.bf16.mxu0 0
  %1645 = vmatpush2.bf16.msra.mxu0 0
  %1646 = vmatprep.subr.bf16.mxu0 0
  %1647 = vmatpush2.bf16.msra.mxu0 0
  %1648 = vmatprep.subr.bf16.mxu0 0
  %1649 = vmatpush2.bf16.msra.mxu0 0
  %1650 = vmatprep.mubr.bf16.mxu0 0
  %1651 = vmatmul.mubr.bf16.gmra.mxu0 %v101
  %v1652 = vpop.f32.mrf.mxu0
  %v1653 = vadd.f32 0.0, %v1652
  %v1654 = vpop.f32.mrf.mxu0
  %v1655 = vpop.f32.mrf.mxu0
  %v1656 = vpop.f32.mrf.mxu0
  %1657 = vdwg.mxu0
  %v1659 = vsel %vm103, %v1390, 0
  %1661 = vmatprep.subr.bf16.mxu0 0
  %1662 = vmatpush1.bf16.msra.mxu0 0
  %1663 = vmatprep.subr.bf16.mxu0 0
  %1664 = vmatpush1.bf16.msra.mxu0 0
  %1665 = vmatprep.subr.bf16.mxu0 0
  %1666 = vmatpush1.bf16.msra.mxu0 0
  %1667 = vmatprep.subr.bf16.mxu0 0
  %1668 = vmatpush1.bf16.msra.mxu0 0
  %1669 = vmatprep.subr.bf16.mxu0 0
  %1670 = vmatpush1.bf16.msra.mxu0 0
  %1671 = vmatprep.subr.bf16.mxu0 0
  %1672 = vmatpush1.bf16.msra.mxu0 0
  %1673 = vmatprep.subr.bf16.mxu0 0
  %1674 = vmatpush1.bf16.msra.mxu0 0
  %1675 = vmatprep.subr.bf16.mxu0 0
  %1676 = vmatpush1.bf16.msra.mxu0 %v1659
  %1677 = vmatprep.subr.bf16.mxu0 0
  %1678 = vmatpush2.bf16.msra.mxu0 0
  %1679 = vmatprep.subr.bf16.mxu0 0
  %1680 = vmatpush2.bf16.msra.mxu0 0
  %1681 = vmatprep.subr.bf16.mxu0 0
  %1682 = vmatpush2.bf16.msra.mxu0 0
  %1683 = vmatprep.subr.bf16.mxu0 0
  %1684 = vmatpush2.bf16.msra.mxu0 0
  %1685 = vmatprep.subr.bf16.mxu0 0
  %1686 = vmatpush2.bf16.msra.mxu0 0
  %1687 = vmatprep.subr.bf16.mxu0 0
  %1688 = vmatpush2.bf16.msra.mxu0 0
  %1689 = vmatprep.subr.bf16.mxu0 0
  %1690 = vmatpush2.bf16.msra.mxu0 0
  %1691 = vmatprep.subr.bf16.mxu0 0
  %1692 = vmatpush2.bf16.msra.mxu0 0
  %1693 = vmatprep.mubr.bf16.mxu0 0
  %1694 = vmatmul.mubr.bf16.gmra.mxu0 %v101
  %v1695 = vpop.f32.mrf.mxu0
  %v1696 = vadd.f32 0.0, %v1695
  %v1697 = vpop.f32.mrf.mxu0
  %v1698 = vpop.f32.mrf.mxu0
  %v1699 = vpop.f32.mrf.mxu0
  %1700 = vdwg.mxu0
  %v1702 = vsel %vm103, %v1391, 0
  %1704 = vmatprep.subr.bf16.mxu0 0
  %1705 = vmatpush1.bf16.msra.mxu0 0
  %1706 = vmatprep.subr.bf16.mxu0 0
  %1707 = vmatpush1.bf16.msra.mxu0 0
  %1708 = vmatprep.subr.bf16.mxu0 0
  %1709 = vmatpush1.bf16.msra.mxu0 0
  %1710 = vmatprep.subr.bf16.mxu0 0
  %1711 = vmatpush1.bf16.msra.mxu0 0
  %1712 = vmatprep.subr.bf16.mxu0 0
  %1713 = vmatpush1.bf16.msra.mxu0 0
  %1714 = vmatprep.subr.bf16.mxu0 0
  %1715 = vmatpush1.bf16.msra.mxu0 0
  %1716 = vmatprep.subr.bf16.mxu0 0
  %1717 = vmatpush1.bf16.msra.mxu0 0
  %1718 = vmatprep.subr.bf16.mxu0 0
  %1719 = vmatpush1.bf16.msra.mxu0 %v1702
  %1720 = vmatprep.subr.bf16.mxu0 0
  %1721 = vmatpush2.bf16.msra.mxu0 0
  %1722 = vmatprep.subr.bf16.mxu0 0
  %1723 = vmatpush2.bf16.msra.mxu0 0
  %1724 = vmatprep.subr.bf16.mxu0 0
  %1725 = vmatpush2.bf16.msra.mxu0 0
  %1726 = vmatprep.subr.bf16.mxu0 0
  %1727 = vmatpush2.bf16.msra.mxu0 0
  %1728 = vmatprep.subr.bf16.mxu0 0
  %1729 = vmatpush2.bf16.msra.mxu0 0
  %1730 = vmatprep.subr.bf16.mxu0 0
  %1731 = vmatpush2.bf16.msra.mxu0 0
  %1732 = vmatprep.subr.bf16.mxu0 0
  %1733 = vmatpush2.bf16.msra.mxu0 0
  %1734 = vmatprep.subr.bf16.mxu0 0
  %1735 = vmatpush2.bf16.msra.mxu0 0
  %1736 = vmatprep.mubr.bf16.mxu0 0
  %1737 = vmatmul.mubr.bf16.gmra.mxu0 %v101
  %v1738 = vpop.f32.mrf.mxu0
  %v1739 = vadd.f32 0.0, %v1738
  %v1740 = vpop.f32.mrf.mxu0
  %v1741 = vpop.f32.mrf.mxu0
  %v1742 = vpop.f32.mrf.mxu0
  %1743 = vdwg.mxu0
  %v1745 = vsel %vm103, %v1392, 0
  %1747 = vmatprep.subr.bf16.mxu0 0
  %1748 = vmatpush1.bf16.msra.mxu0 0
  %1749 = vmatprep.subr.bf16.mxu0 0
  %1750 = vmatpush1.bf16.msra.mxu0 0
  %1751 = vmatprep.subr.bf16.mxu0 0
  %1752 = vmatpush1.bf16.msra.mxu0 0
  %1753 = vmatprep.subr.bf16.mxu0 0
  %1754 = vmatpush1.bf16.msra.mxu0 0
  %1755 = vmatprep.subr.bf16.mxu0 0
  %1756 = vmatpush1.bf16.msra.mxu0 0
  %1757 = vmatprep.subr.bf16.mxu0 0
  %1758 = vmatpush1.bf16.msra.mxu0 0
  %1759 = vmatprep.subr.bf16.mxu0 0
  %1760 = vmatpush1.bf16.msra.mxu0 0
  %1761 = vmatprep.subr.bf16.mxu0 0
  %1762 = vmatpush1.bf16.msra.mxu0 %v1745
  %1763 = vmatprep.subr.bf16.mxu0 0
  %1764 = vmatpush2.bf16.msra.mxu0 0
  %1765 = vmatprep.subr.bf16.mxu0 0
  %1766 = vmatpush2.bf16.msra.mxu0 0
  %1767 = vmatprep.subr.bf16.mxu0 0
  %1768 = vmatpush2.bf16.msra.mxu0 0
  %1769 = vmatprep.subr.bf16.mxu0 0
  %1770 = vmatpush2.bf16.msra.mxu0 0
  %1771 = vmatprep.subr.bf16.mxu0 0
  %1772 = vmatpush2.bf16.msra.mxu0 0
  %1773 = vmatprep.subr.bf16.mxu0 0
  %1774 = vmatpush2.bf16.msra.mxu0 0
  %1775 = vmatprep.subr.bf16.mxu0 0
  %1776 = vmatpush2.bf16.msra.mxu0 0
  %1777 = vmatprep.subr.bf16.mxu0 0
  %1778 = vmatpush2.bf16.msra.mxu0 0
  %1779 = vmatprep.mubr.bf16.mxu0 0
  %1780 = vmatmul.mubr.bf16.gmra.mxu0 %v101
  %v1781 = vpop.f32.mrf.mxu0
  %v1782 = vadd.f32 0.0, %v1781
  %v1783 = vpop.f32.mrf.mxu0
  %v1784 = vpop.f32.mrf.mxu0
  %v1785 = vpop.f32.mrf.mxu0
  %1786 = vdwg.mxu0
  %v1788 = vsel %vm103, %v1393, 0
  %1790 = vmatprep.subr.bf16.mxu0 0
  %1791 = vmatpush1.bf16.msra.mxu0 0
  %1792 = vmatprep.subr.bf16.mxu0 0
  %1793 = vmatpush1.bf16.msra.mxu0 0
  %1794 = vmatprep.subr.bf16.mxu0 0
  %1795 = vmatpush1.bf16.msra.mxu0 0
  %1796 = vmatprep.subr.bf16.mxu0 0
  %1797 = vmatpush1.bf16.msra.mxu0 0
  %1798 = vmatprep.subr.bf16.mxu0 0
  %1799 = vmatpush1.bf16.msra.mxu0 0
  %1800 = vmatprep.subr.bf16.mxu0 0
  %1801 = vmatpush1.bf16.msra.mxu0 0
  %1802 = vmatprep.subr.bf16.mxu0 0
  %1803 = vmatpush1.bf16.msra.mxu0 0
  %1804 = vmatprep.subr.bf16.mxu0 0
  %1805 = vmatpush1.bf16.msra.mxu0 %v1788
  %1806 = vmatprep.subr.bf16.mxu0 0
  %1807 = vmatpush2.bf16.msra.mxu0 0
  %1808 = vmatprep.subr.bf16.mxu0 0
  %1809 = vmatpush2.bf16.msra.mxu0 0
  %1810 = vmatprep.subr.bf16.mxu0 0
  %1811 = vmatpush2.bf16.msra.mxu0 0
  %1812 = vmatprep.subr.bf16.mxu0 0
  %1813 = vmatpush2.bf16.msra.mxu0 0
  %1814 = vmatprep.subr.bf16.mxu0 0
  %1815 = vmatpush2.bf16.msra.mxu0 0
  %1816 = vmatprep.subr.bf16.mxu0 0
  %1817 = vmatpush2.bf16.msra.mxu0 0
  %1818 = vmatprep.subr.bf16.mxu0 0
  %1819 = vmatpush2.bf16.msra.mxu0 0
  %1820 = vmatprep.subr.bf16.mxu0 0
  %1821 = vmatpush2.bf16.msra.mxu0 0
  %1822 = vmatprep.mubr.bf16.mxu0 0
  %1823 = vmatmul.mubr.bf16.gmra.mxu0 %v101
  %v1824 = vpop.f32.mrf.mxu0
  %v1825 = vadd.f32 0.0, %v1824
  %v1826 = vpop.f32.mrf.mxu0
  %v1827 = vpop.f32.mrf.mxu0
  %v1828 = vpop.f32.mrf.mxu0
  %1829 = vdwg.mxu0
  %v1831 = vsel %vm103, %v1394, 0
  %1833 = vmatprep.subr.bf16.mxu0 0
  %1834 = vmatpush1.bf16.msra.mxu0 0
  %1835 = vmatprep.subr.bf16.mxu0 0
  %1836 = vmatpush1.bf16.msra.mxu0 0
  %1837 = vmatprep.subr.bf16.mxu0 0
  %1838 = vmatpush1.bf16.msra.mxu0 0
  %1839 = vmatprep.subr.bf16.mxu0 0
  %1840 = vmatpush1.bf16.msra.mxu0 0
  %1841 = vmatprep.subr.bf16.mxu0 0
  %1842 = vmatpush1.bf16.msra.mxu0 0
  %1843 = vmatprep.subr.bf16.mxu0 0
  %1844 = vmatpush1.bf16.msra.mxu0 0
  %1845 = vmatprep.subr.bf16.mxu0 0
  %1846 = vmatpush1.bf16.msra.mxu0 0
  %1847 = vmatprep.subr.bf16.mxu0 0
  %1848 = vmatpush1.bf16.msra.mxu0 %v1831
  %1849 = vmatprep.subr.bf16.mxu0 0
  %1850 = vmatpush2.bf16.msra.mxu0 0
  %1851 = vmatprep.subr.bf16.mxu0 0
  %1852 = vmatpush2.bf16.msra.mxu0 0
  %1853 = vmatprep.subr.bf16.mxu0 0
  %1854 = vmatpush2.bf16.msra.mxu0 0
  %1855 = vmatprep.subr.bf16.mxu0 0
  %1856 = vmatpush2.bf16.msra.mxu0 0
  %1857 = vmatprep.subr.bf16.mxu0 0
  %1858 = vmatpush2.bf16.msra.mxu0 0
  %1859 = vmatprep.subr.bf16.mxu0 0
  %1860 = vmatpush2.bf16.msra.mxu0 0
  %1861 = vmatprep.subr.bf16.mxu0 0
  %1862 = vmatpush2.bf16.msra.mxu0 0
  %1863 = vmatprep.subr.bf16.mxu0 0
  %1864 = vmatpush2.bf16.msra.mxu0 0
  %1865 = vmatprep.mubr.bf16.mxu0 0
  %1866 = vmatmul.mubr.bf16.gmra.mxu0 %v101
  %v1867 = vpop.f32.mrf.mxu0
  %v1868 = vadd.f32 0.0, %v1867
  %v1869 = vpop.f32.mrf.mxu0
  %v1870 = vpop.f32.mrf.mxu0
  %v1871 = vpop.f32.mrf.mxu0
  %1872 = vdwg.mxu0
  %v1874 = vsel %vm103, %v1395, 0
  %1876 = vmatprep.subr.bf16.mxu0 0
  %1877 = vmatpush1.bf16.msra.mxu0 0
  %1878 = vmatprep.subr.bf16.mxu0 0
  %1879 = vmatpush1.bf16.msra.mxu0 0
  %1880 = vmatprep.subr.bf16.mxu0 0
  %1881 = vmatpush1.bf16.msra.mxu0 0
  %1882 = vmatprep.subr.bf16.mxu0 0
  %1883 = vmatpush1.bf16.msra.mxu0 0
  %1884 = vmatprep.subr.bf16.mxu0 0
  %1885 = vmatpush1.bf16.msra.mxu0 0
  %1886 = vmatprep.subr.bf16.mxu0 0
  %1887 = vmatpush1.bf16.msra.mxu0 0
  %1888 = vmatprep.subr.bf16.mxu0 0
  %1889 = vmatpush1.bf16.msra.mxu0 0
  %1890 = vmatprep.subr.bf16.mxu0 0
  %1891 = vmatpush1.bf16.msra.mxu0 %v1874
  %1892 = vmatprep.subr.bf16.mxu0 0
  %1893 = vmatpush2.bf16.msra.mxu0 0
  %1894 = vmatprep.subr.bf16.mxu0 0
  %1895 = vmatpush2.bf16.msra.mxu0 0
  %1896 = vmatprep.subr.bf16.mxu0 0
  %1897 = vmatpush2.bf16.msra.mxu0 0
  %1898 = vmatprep.subr.bf16.mxu0 0
  %1899 = vmatpush2.bf16.msra.mxu0 0
  %1900 = vmatprep.subr.bf16.mxu0 0
  %1901 = vmatpush2.bf16.msra.mxu0 0
  %1902 = vmatprep.subr.bf16.mxu0 0
  %1903 = vmatpush2.bf16.msra.mxu0 0
  %1904 = vmatprep.subr.bf16.mxu0 0
  %1905 = vmatpush2.bf16.msra.mxu0 0
  %1906 = vmatprep.subr.bf16.mxu0 0
  %1907 = vmatpush2.bf16.msra.mxu0 0
  %1908 = vmatprep.mubr.bf16.mxu0 0
  %1909 = vmatmul.mubr.bf16.gmra.mxu0 %v101
  %v1910 = vpop.f32.mrf.mxu0
  %v1911 = vadd.f32 0.0, %v1910
  %v1912 = vpop.f32.mrf.mxu0
  %v1913 = vpop.f32.mrf.mxu0
  %v1914 = vpop.f32.mrf.mxu0
  %1915 = vdwg.mxu0
  %v1917 = vsel %vm103, %v1396, 0
  %1919 = vmatprep.subr.bf16.mxu0 0
  %1920 = vmatpush1.bf16.msra.mxu0 0
  %1921 = vmatprep.subr.bf16.mxu0 0
  %1922 = vmatpush1.bf16.msra.mxu0 0
  %1923 = vmatprep.subr.bf16.mxu0 0
  %1924 = vmatpush1.bf16.msra.mxu0 0
  %1925 = vmatprep.subr.bf16.mxu0 0
  %1926 = vmatpush1.bf16.msra.mxu0 0
  %1927 = vmatprep.subr.bf16.mxu0 0
  %1928 = vmatpush1.bf16.msra.mxu0 0
  %1929 = vmatprep.subr.bf16.mxu0 0
  %1930 = vmatpush1.bf16.msra.mxu0 0
  %1931 = vmatprep.subr.bf16.mxu0 0
  %1932 = vmatpush1.bf16.msra.mxu0 0
  %1933 = vmatprep.subr.bf16.mxu0 0
  %1934 = vmatpush1.bf16.msra.mxu0 %v1917
  %1935 = vmatprep.subr.bf16.mxu0 0
  %1936 = vmatpush2.bf16.msra.mxu0 0
  %1937 = vmatprep.subr.bf16.mxu0 0
  %1938 = vmatpush2.bf16.msra.mxu0 0
  %1939 = vmatprep.subr.bf16.mxu0 0
  %1940 = vmatpush2.bf16.msra.mxu0 0
  %1941 = vmatprep.subr.bf16.mxu0 0
  %1942 = vmatpush2.bf16.msra.mxu0 0
  %1943 = vmatprep.subr.bf16.mxu0 0
  %1944 = vmatpush2.bf16.msra.mxu0 0
  %1945 = vmatprep.subr.bf16.mxu0 0
  %1946 = vmatpush2.bf16.msra.mxu0 0
  %1947 = vmatprep.subr.bf16.mxu0 0
  %1948 = vmatpush2.bf16.msra.mxu0 0
  %1949 = vmatprep.subr.bf16.mxu0 0
  %1950 = vmatpush2.bf16.msra.mxu0 0
  %1951 = vmatprep.mubr.bf16.mxu0 0
  %1952 = vmatmul.mubr.bf16.gmra.mxu0 %v101
  %v1953 = vpop.f32.mrf.mxu0
  %v1954 = vadd.f32 0.0, %v1953
  %v1955 = vpop.f32.mrf.mxu0
  %v1956 = vpop.f32.mrf.mxu0
  %v1957 = vpop.f32.mrf.mxu0
  %1958 = vdwg.mxu0
  %v1960 = vsel %vm103, %v1397, 0
  %1962 = vmatprep.subr.bf16.mxu0 0
  %1963 = vmatpush1.bf16.msra.mxu0 0
  %1964 = vmatprep.subr.bf16.mxu0 0
  %1965 = vmatpush1.bf16.msra.mxu0 0
  %1966 = vmatprep.subr.bf16.mxu0 0
  %1967 = vmatpush1.bf16.msra.mxu0 0
  %1968 = vmatprep.subr.bf16.mxu0 0
  %1969 = vmatpush1.bf16.msra.mxu0 0
  %1970 = vmatprep.subr.bf16.mxu0 0
  %1971 = vmatpush1.bf16.msra.mxu0 0
  %1972 = vmatprep.subr.bf16.mxu0 0
  %1973 = vmatpush1.bf16.msra.mxu0 0
  %1974 = vmatprep.subr.bf16.mxu0 0
  %1975 = vmatpush1.bf16.msra.mxu0 0
  %1976 = vmatprep.subr.bf16.mxu0 0
  %1977 = vmatpush1.bf16.msra.mxu0 %v1960
  %1978 = vmatprep.subr.bf16.mxu0 0
  %1979 = vmatpush2.bf16.msra.mxu0 0
  %1980 = vmatprep.subr.bf16.mxu0 0
  %1981 = vmatpush2.bf16.msra.mxu0 0
  %1982 = vmatprep.subr.bf16.mxu0 0
  %1983 = vmatpush2.bf16.msra.mxu0 0
  %1984 = vmatprep.subr.bf16.mxu0 0
  %1985 = vmatpush2.bf16.msra.mxu0 0
  %1986 = vmatprep.subr.bf16.mxu0 0
  %1987 = vmatpush2.bf16.msra.mxu0 0
  %1988 = vmatprep.subr.bf16.mxu0 0
  %1989 = vmatpush2.bf16.msra.mxu0 0
  %1990 = vmatprep.subr.bf16.mxu0 0
  %1991 = vmatpush2.bf16.msra.mxu0 0
  %1992 = vmatprep.subr.bf16.mxu0 0
  %1993 = vmatpush2.bf16.msra.mxu0 0
  %1994 = vmatprep.mubr.bf16.mxu0 0
  %1995 = vmatmul.mubr.bf16.gmra.mxu0 %v101
  %v1996 = vpop.f32.mrf.mxu0
  %v1997 = vadd.f32 0.0, %v1996
  %v1998 = vpop.f32.mrf.mxu0
  %v1999 = vpop.f32.mrf.mxu0
  %v2000 = vpop.f32.mrf.mxu0
  %2001 = vdwg.mxu0
  %v2003 = vsel %vm103, %v1398, 0
  %2005 = vmatprep.subr.bf16.mxu0 0
  %2006 = vmatpush1.bf16.msra.mxu0 0
  %2007 = vmatprep.subr.bf16.mxu0 0
  %2008 = vmatpush1.bf16.msra.mxu0 0
  %2009 = vmatprep.subr.bf16.mxu0 0
  %2010 = vmatpush1.bf16.msra.mxu0 0
  %2011 = vmatprep.subr.bf16.mxu0 0
  %2012 = vmatpush1.bf16.msra.mxu0 0
  %2013 = vmatprep.subr.bf16.mxu0 0
  %2014 = vmatpush1.bf16.msra.mxu0 0
  %2015 = vmatprep.subr.bf16.mxu0 0
  %2016 = vmatpush1.bf16.msra.mxu0 0
  %2017 = vmatprep.subr.bf16.mxu0 0
  %2018 = vmatpush1.bf16.msra.mxu0 0
  %2019 = vmatprep.subr.bf16.mxu0 0
  %2020 = vmatpush1.bf16.msra.mxu0 %v2003
  %2021 = vmatprep.subr.bf16.mxu0 0
  %2022 = vmatpush2.bf16.msra.mxu0 0
  %2023 = vmatprep.subr.bf16.mxu0 0
  %2024 = vmatpush2.bf16.msra.mxu0 0
  %2025 = vmatprep.subr.bf16.mxu0 0
  %2026 = vmatpush2.bf16.msra.mxu0 0
  %2027 = vmatprep.subr.bf16.mxu0 0
  %2028 = vmatpush2.bf16.msra.mxu0 0
  %2029 = vmatprep.subr.bf16.mxu0 0
  %2030 = vmatpush2.bf16.msra.mxu0 0
  %2031 = vmatprep.subr.bf16.mxu0 0
  %2032 = vmatpush2.bf16.msra.mxu0 0
  %2033 = vmatprep.subr.bf16.mxu0 0
  %2034 = vmatpush2.bf16.msra.mxu0 0
  %2035 = vmatprep.subr.bf16.mxu0 0
  %2036 = vmatpush2.bf16.msra.mxu0 0
  %2037 = vmatprep.mubr.bf16.mxu0 0
  %2038 = vmatmul.mubr.bf16.gmra.mxu0 %v101
  %v2039 = vpop.f32.mrf.mxu0
  %v2040 = vadd.f32 0.0, %v2039
  %v2041 = vpop.f32.mrf.mxu0
  %v2042 = vpop.f32.mrf.mxu0
  %v2043 = vpop.f32.mrf.mxu0
  %2044 = vdwg.mxu0
  %v2046 = vsel %vm103, %v1399, 0
  %2048 = vmatprep.subr.bf16.mxu0 0
  %2049 = vmatpush1.bf16.msra.mxu0 0
  %2050 = vmatprep.subr.bf16.mxu0 0
  %2051 = vmatpush1.bf16.msra.mxu0 0
  %2052 = vmatprep.subr.bf16.mxu0 0
  %2053 = vmatpush1.bf16.msra.mxu0 0
  %2054 = vmatprep.subr.bf16.mxu0 0
  %2055 = vmatpush1.bf16.msra.mxu0 0
  %2056 = vmatprep.subr.bf16.mxu0 0
  %2057 = vmatpush1.bf16.msra.mxu0 0
  %2058 = vmatprep.subr.bf16.mxu0 0
  %2059 = vmatpush1.bf16.msra.mxu0 0
  %2060 = vmatprep.subr.bf16.mxu0 0
  %2061 = vmatpush1.bf16.msra.mxu0 0
  %2062 = vmatprep.subr.bf16.mxu0 0
  %2063 = vmatpush1.bf16.msra.mxu0 %v2046
  %2064 = vmatprep.subr.bf16.mxu0 0
  %2065 = vmatpush2.bf16.msra.mxu0 0
  %2066 = vmatprep.subr.bf16.mxu0 0
  %2067 = vmatpush2.bf16.msra.mxu0 0
  %2068 = vmatprep.subr.bf16.mxu0 0
  %2069 = vmatpush2.bf16.msra.mxu0 0
  %2070 = vmatprep.subr.bf16.mxu0 0
  %2071 = vmatpush2.bf16.msra.mxu0 0
  %2072 = vmatprep.subr.bf16.mxu0 0
  %2073 = vmatpush2.bf16.msra.mxu0 0
  %2074 = vmatprep.subr.bf16.mxu0 0
  %2075 = vmatpush2.bf16.msra.mxu0 0
  %2076 = vmatprep.subr.bf16.mxu0 0
  %2077 = vmatpush2.bf16.msra.mxu0 0
  %2078 = vmatprep.subr.bf16.mxu0 0
  %2079 = vmatpush2.bf16.msra.mxu0 0
  %2080 = vmatprep.mubr.bf16.mxu0 0
  %2081 = vmatmul.mubr.bf16.gmra.mxu0 %v101
  %v2082 = vpop.f32.mrf.mxu0
  %v2083 = vadd.f32 0.0, %v2082
  %v2084 = vpop.f32.mrf.mxu0
  %v2085 = vpop.f32.mrf.mxu0
  %v2086 = vpop.f32.mrf.mxu0
  %2087 = vdwg.mxu0
  %v2088 = vmul.f32 %v1290, 0.05
  %v2089 = vmul.f32 %v1293, 0.05
  %v2090 = vmul.f32 %v1298, 0.05
  %v2091 = vmul.f32 %v1301, 0.05
  %v2092 = vmul.f32 %v1306, 0.05
  %v2093 = vmul.f32 %v1309, 0.05
  %v2094 = vmul.f32 %v1314, 0.05
  %v2095 = vmul.f32 %v1317, 0.05
  %v2096 = vmul.f32 %v1322, 0.05
  %v2097 = vmul.f32 %v1325, 0.05
  %v2098 = vmul.f32 %v1330, 0.05
  %v2099 = vmul.f32 %v1333, 0.05
  %v2100 = vmul.f32 %v1338, 0.05
  %v2101 = vmul.f32 %v1341, 0.05
  %v2102 = vmul.f32 %v1346, 0.05
  %v2103 = vmul.f32 %v1349, 0.05
  %v2104 = vmul.f32 %v1438, 0.95
  %v2105 = vmul.f32 %v1481, 0.95
  %v2106 = vmul.f32 %v1524, 0.95
  %v2107 = vmul.f32 %v1567, 0.95
  %v2108 = vmul.f32 %v1610, 0.95
  %v2109 = vmul.f32 %v1653, 0.95
  %v2110 = vmul.f32 %v1696, 0.95
  %v2111 = vmul.f32 %v1739, 0.95
  %v2112 = vmul.f32 %v1782, 0.95
  %v2113 = vmul.f32 %v1825, 0.95
  %v2114 = vmul.f32 %v1868, 0.95
  %v2115 = vmul.f32 %v1911, 0.95
  %v2116 = vmul.f32 %v1954, 0.95
  %v2117 = vmul.f32 %v1997, 0.95
  %v2118 = vmul.f32 %v2040, 0.95
  %v2119 = vmul.f32 %v2083, 0.95
  %v2120 = vadd.f32 %v2088, %v2104
  %v2121 = vadd.f32 %v2089, %v2105
  %v2122 = vadd.f32 %v2090, %v2106
  %v2123 = vadd.f32 %v2091, %v2107
  %v2124 = vadd.f32 %v2092, %v2108
  %v2125 = vadd.f32 %v2093, %v2109
  %v2126 = vadd.f32 %v2094, %v2110
  %v2127 = vadd.f32 %v2095, %v2111
  %v2128 = vadd.f32 %v2096, %v2112
  %v2129 = vadd.f32 %v2097, %v2113
  %v2130 = vadd.f32 %v2098, %v2114
  %v2131 = vadd.f32 %v2099, %v2115
  %v2132 = vadd.f32 %v2100, %v2116
  %v2133 = vadd.f32 %v2101, %v2117
  %v2134 = vadd.f32 %v2102, %v2118
  %v2135 = vadd.f32 %v2103, %v2119
  %v2136 = vld [vmem:[%s4] sm:$0xf]
  %v2137 = vld [vmem:[%s4 + $0x4] sm:$0xf]
  %v2138 = vld [vmem:[%s4 + $0x8] sm:$0xf]
  %v2139 = vld [vmem:[%s4 + $0xc] sm:$0xf]
  %v2140 = vld [vmem:[%s4 + $0x10] sm:$0xf]
  %v2141 = vld [vmem:[%s4 + $0x14] sm:$0xf]
  %v2142 = vld [vmem:[%s4 + $0x18] sm:$0xf]
  %v2143 = vld [vmem:[%s4 + $0x1c] sm:$0xf]
  %v2144 = vpack.c.bf16 %v2121, %v2120
  %v2145 = vpack.c.bf16 %v2123, %v2122
  %v2146 = vpack.c.bf16 %v2125, %v2124
  %v2147 = vpack.c.bf16 %v2127, %v2126
  %v2148 = vpack.c.bf16 %v2129, %v2128
  %v2149 = vpack.c.bf16 %v2131, %v2130
  %v2150 = vpack.c.bf16 %v2133, %v2132
  %v2151 = vpack.c.bf16 %v2135, %v2134
  %v2152 = vld [vmem:[%s5] sm:$0xf]
  %v2153 = vld [vmem:[%s5 + $0x4] sm:$0xf]
  %v2154 = vld [vmem:[%s5 + $0x8] sm:$0xf]
  %v2155 = vld [vmem:[%s5 + $0xc] sm:$0xf]
  %v2156 = vld [vmem:[%s5 + $0x10] sm:$0xf]
  %v2157 = vld [vmem:[%s5 + $0x14] sm:$0xf]
  %v2158 = vld [vmem:[%s5 + $0x18] sm:$0xf]
  %v2159 = vld [vmem:[%s5 + $0x1c] sm:$0xf]
  %v2168 = vunpack.c.l.b16 %v2152
  %v2169 = vunpack.c.l.b16 %v2153
  %v2170 = vunpack.c.l.b16 %v2154
  %v2171 = vunpack.c.l.b16 %v2155
  %v2172 = vunpack.c.l.b16 %v2156
  %v2173 = vunpack.c.l.b16 %v2157
  %v2174 = vunpack.c.l.b16 %v2158
  %v2175 = vunpack.c.l.b16 %v2159
  %v2176 = vpack.c.b16 %v2169, %v2168
  %v2177 = vpack.c.b16 %v2171, %v2170
  %v2178 = vpack.c.b16 %v2173, %v2172
  %v2179 = vpack.c.b16 %v2175, %v2174
  %vm2184 = vcmask 523264
  %v2186 = vsel %vm2184, %v2144, 0
  %v2189 = vsel %vm2184, %v2145, 0
  %v2192 = vsel %vm2184, %v2146, 0
  %v2195 = vsel %vm2184, %v2147, 0
  %v2198 = vsel %vm2184, %v2148, 0
  %v2201 = vsel %vm2184, %v2149, 0
  %v2204 = vsel %vm2184, %v2150, 0
  %v2207 = vsel %vm2184, %v2151, 0
  %2209 = vmatprep.subr.bf16.mxu0 0
  %2210 = vmatpush1.bf16.msra.mxu0 0
  %2211 = vmatprep.subr.bf16.mxu0 0
  %2212 = vmatpush1.bf16.msra.mxu0 0
  %2213 = vmatprep.subr.bf16.mxu0 0
  %2214 = vmatpush1.bf16.msra.mxu0 0
  %2215 = vmatprep.subr.bf16.mxu0 0
  %2216 = vmatpush1.bf16.msra.mxu0 0
  %2217 = vmatprep.subr.bf16.mxu0 0
  %2218 = vmatpush1.bf16.msra.mxu0 %v2179
  %2219 = vmatprep.subr.bf16.mxu0 0
  %2220 = vmatpush1.bf16.msra.mxu0 %v2178
  %2221 = vmatprep.subr.bf16.mxu0 0
  %2222 = vmatpush1.bf16.msra.mxu0 %v2177
  %2223 = vmatprep.subr.bf16.mxu0 0
  %2224 = vmatpush1.bf16.msra.mxu0 %v2176
  %2225 = vmatprep.subr.bf16.mxu0 0
  %2226 = vmatpush2.bf16.msra.mxu0 0
  %2227 = vmatprep.subr.bf16.mxu0 0
  %2228 = vmatpush2.bf16.msra.mxu0 0
  %2229 = vmatprep.subr.bf16.mxu0 0
  %2230 = vmatpush2.bf16.msra.mxu0 0
  %2231 = vmatprep.subr.bf16.mxu0 0
  %2232 = vmatpush2.bf16.msra.mxu0 0
  %2233 = vmatprep.subr.bf16.mxu0 0
  %2234 = vmatpush2.bf16.msra.mxu0 0
  %2235 = vmatprep.subr.bf16.mxu0 0
  %2236 = vmatpush2.bf16.msra.mxu0 0
  %2237 = vmatprep.subr.bf16.mxu0 0
  %2238 = vmatpush2.bf16.msra.mxu0 0
  %2239 = vmatprep.subr.bf16.mxu0 0
  %2240 = vmatpush2.bf16.msra.mxu0 0
  %2241 = vmatprep.mubr.bf16.mxu0 0
  %2242 = vmatmul.mubr.bf16.gmra.mxu0 %v2186
  %v2243 = vpop.f32.mrf.mxu0
  %v2244 = vadd.f32 0.0, %v2243
  %v2245 = vpop.f32.mrf.mxu0
  %v2246 = vpop.f32.mrf.mxu0
  %v2247 = vadd.f32 0.0, %v2246
  %v2248 = vpop.f32.mrf.mxu0
  %2249 = vmatprep.mubr.bf16.mxu0 0
  %2250 = vmatmul.mubr.bf16.gmra.mxu0 %v2189
  %v2251 = vpop.f32.mrf.mxu0
  %v2252 = vadd.f32 0.0, %v2251
  %v2253 = vpop.f32.mrf.mxu0
  %v2254 = vpop.f32.mrf.mxu0
  %v2255 = vadd.f32 0.0, %v2254
  %v2256 = vpop.f32.mrf.mxu0
  %2257 = vmatprep.mubr.bf16.mxu0 0
  %2258 = vmatmul.mubr.bf16.gmra.mxu0 %v2192
  %v2259 = vpop.f32.mrf.mxu0
  %v2260 = vadd.f32 0.0, %v2259
  %v2261 = vpop.f32.mrf.mxu0
  %v2262 = vpop.f32.mrf.mxu0
  %v2263 = vadd.f32 0.0, %v2262
  %v2264 = vpop.f32.mrf.mxu0
  %2265 = vmatprep.mubr.bf16.mxu0 0
  %2266 = vmatmul.mubr.bf16.gmra.mxu0 %v2195
  %v2267 = vpop.f32.mrf.mxu0
  %v2268 = vadd.f32 0.0, %v2267
  %v2269 = vpop.f32.mrf.mxu0
  %v2270 = vpop.f32.mrf.mxu0
  %v2271 = vadd.f32 0.0, %v2270
  %v2272 = vpop.f32.mrf.mxu0
  %2273 = vmatprep.mubr.bf16.mxu0 0
  %2274 = vmatmul.mubr.bf16.gmra.mxu0 %v2198
  %v2275 = vpop.f32.mrf.mxu0
  %v2276 = vadd.f32 0.0, %v2275
  %v2277 = vpop.f32.mrf.mxu0
  %v2278 = vpop.f32.mrf.mxu0
  %v2279 = vadd.f32 0.0, %v2278
  %v2280 = vpop.f32.mrf.mxu0
  %2281 = vmatprep.mubr.bf16.mxu0 0
  %2282 = vmatmul.mubr.bf16.gmra.mxu0 %v2201
  %v2283 = vpop.f32.mrf.mxu0
  %v2284 = vadd.f32 0.0, %v2283
  %v2285 = vpop.f32.mrf.mxu0
  %v2286 = vpop.f32.mrf.mxu0
  %v2287 = vadd.f32 0.0, %v2286
  %v2288 = vpop.f32.mrf.mxu0
  %2289 = vmatprep.mubr.bf16.mxu0 0
  %2290 = vmatmul.mubr.bf16.gmra.mxu0 %v2204
  %v2291 = vpop.f32.mrf.mxu0
  %v2292 = vadd.f32 0.0, %v2291
  %v2293 = vpop.f32.mrf.mxu0
  %v2294 = vpop.f32.mrf.mxu0
  %v2295 = vadd.f32 0.0, %v2294
  %v2296 = vpop.f32.mrf.mxu0
  %2297 = vmatprep.mubr.bf16.mxu0 0
  %2298 = vmatmul.mubr.bf16.gmra.mxu0 %v2207
  %v2299 = vpop.f32.mrf.mxu0
  %v2300 = vadd.f32 0.0, %v2299
  %v2301 = vpop.f32.mrf.mxu0
  %v2302 = vpop.f32.mrf.mxu0
  %v2303 = vadd.f32 0.0, %v2302
  %v2304 = vpop.f32.mrf.mxu0
  %2305 = vdwg.mxu0
  %v2314 = vunpack.c.l.b16 %v2136
  %v2315 = vunpack.c.l.b16 %v2137
  %v2316 = vunpack.c.l.b16 %v2138
  %v2317 = vunpack.c.l.b16 %v2139
  %v2318 = vunpack.c.l.b16 %v2140
  %v2319 = vunpack.c.l.b16 %v2141
  %v2320 = vunpack.c.l.b16 %v2142
  %v2321 = vunpack.c.l.b16 %v2143
  %v2322 = vpack.c.b16 %v2315, %v2314
  %v2323 = vpack.c.b16 %v2317, %v2316
  %v2324 = vpack.c.b16 %v2319, %v2318
  %v2325 = vpack.c.b16 %v2321, %v2320
  %v2331 = vsel %vm2184, %v1352, 0
  %v2334 = vsel %vm2184, %v1353, 0
  %v2337 = vsel %vm2184, %v1354, 0
  %v2340 = vsel %vm2184, %v1355, 0
  %v2343 = vsel %vm2184, %v1356, 0
  %v2346 = vsel %vm2184, %v1357, 0
  %v2349 = vsel %vm2184, %v1358, 0
  %v2352 = vsel %vm2184, %v1359, 0
  %2354 = vmatprep.subr.bf16.mxu0 0
  %2355 = vmatpush1.bf16.msra.mxu0 0
  %2356 = vmatprep.subr.bf16.mxu0 0
  %2357 = vmatpush1.bf16.msra.mxu0 0
  %2358 = vmatprep.subr.bf16.mxu0 0
  %2359 = vmatpush1.bf16.msra.mxu0 0
  %2360 = vmatprep.subr.bf16.mxu0 0
  %2361 = vmatpush1.bf16.msra.mxu0 0
  %2362 = vmatprep.subr.bf16.mxu0 0
  %2363 = vmatpush1.bf16.msra.mxu0 %v2325
  %2364 = vmatprep.subr.bf16.mxu0 0
  %2365 = vmatpush1.bf16.msra.mxu0 %v2324
  %2366 = vmatprep.subr.bf16.mxu0 0
  %2367 = vmatpush1.bf16.msra.mxu0 %v2323
  %2368 = vmatprep.subr.bf16.mxu0 0
  %2369 = vmatpush1.bf16.msra.mxu0 %v2322
  %2370 = vmatprep.subr.bf16.mxu0 0
  %2371 = vmatpush2.bf16.msra.mxu0 0
  %2372 = vmatprep.subr.bf16.mxu0 0
  %2373 = vmatpush2.bf16.msra.mxu0 0
  %2374 = vmatprep.subr.bf16.mxu0 0
  %2375 = vmatpush2.bf16.msra.mxu0 0
  %2376 = vmatprep.subr.bf16.mxu0 0
  %2377 = vmatpush2.bf16.msra.mxu0 0
  %2378 = vmatprep.subr.bf16.mxu0 0
  %2379 = vmatpush2.bf16.msra.mxu0 0
  %2380 = vmatprep.subr.bf16.mxu0 0
  %2381 = vmatpush2.bf16.msra.mxu0 0
  %2382 = vmatprep.subr.bf16.mxu0 0
  %2383 = vmatpush2.bf16.msra.mxu0 0
  %2384 = vmatprep.subr.bf16.mxu0 0
  %2385 = vmatpush2.bf16.msra.mxu0 0
  %2386 = vmatprep.mubr.bf16.mxu0 0
  %2387 = vmatmul.mubr.bf16.gmra.mxu0 %v2331
  %v2388 = vpop.f32.mrf.mxu0
  %v2389 = vadd.f32 %v2244, %v2388
  %v2390 = vpop.f32.mrf.mxu0
  %v2391 = vpop.f32.mrf.mxu0
  %v2392 = vadd.f32 %v2247, %v2391
  %v2393 = vpop.f32.mrf.mxu0
  %2394 = vmatprep.mubr.bf16.mxu0 0
  %2395 = vmatmul.mubr.bf16.gmra.mxu0 %v2334
  %v2396 = vpop.f32.mrf.mxu0
  %v2397 = vadd.f32 %v2252, %v2396
  %v2398 = vpop.f32.mrf.mxu0
  %v2399 = vpop.f32.mrf.mxu0
  %v2400 = vadd.f32 %v2255, %v2399
  %v2401 = vpop.f32.mrf.mxu0
  %2402 = vmatprep.mubr.bf16.mxu0 0
  %2403 = vmatmul.mubr.bf16.gmra.mxu0 %v2337
  %v2404 = vpop.f32.mrf.mxu0
  %v2405 = vadd.f32 %v2260, %v2404
  %v2406 = vpop.f32.mrf.mxu0
  %v2407 = vpop.f32.mrf.mxu0
  %v2408 = vadd.f32 %v2263, %v2407
  %v2409 = vpop.f32.mrf.mxu0
  %2410 = vmatprep.mubr.bf16.mxu0 0
  %2411 = vmatmul.mubr.bf16.gmra.mxu0 %v2340
  %v2412 = vpop.f32.mrf.mxu0
  %v2413 = vadd.f32 %v2268, %v2412
  %v2414 = vpop.f32.mrf.mxu0
  %v2415 = vpop.f32.mrf.mxu0
  %v2416 = vadd.f32 %v2271, %v2415
  %v2417 = vpop.f32.mrf.mxu0
  %2418 = vmatprep.mubr.bf16.mxu0 0
  %2419 = vmatmul.mubr.bf16.gmra.mxu0 %v2343
  %v2420 = vpop.f32.mrf.mxu0
  %v2421 = vadd.f32 %v2276, %v2420
  %v2422 = vpop.f32.mrf.mxu0
  %v2423 = vpop.f32.mrf.mxu0
  %v2424 = vadd.f32 %v2279, %v2423
  %v2425 = vpop.f32.mrf.mxu0
  %2426 = vmatprep.mubr.bf16.mxu0 0
  %2427 = vmatmul.mubr.bf16.gmra.mxu0 %v2346
  %v2428 = vpop.f32.mrf.mxu0
  %v2429 = vadd.f32 %v2284, %v2428
  %v2430 = vpop.f32.mrf.mxu0
  %v2431 = vpop.f32.mrf.mxu0
  %v2432 = vadd.f32 %v2287, %v2431
  %v2433 = vpop.f32.mrf.mxu0
  %2434 = vmatprep.mubr.bf16.mxu0 0
  %2435 = vmatmul.mubr.bf16.gmra.mxu0 %v2349
  %v2436 = vpop.f32.mrf.mxu0
  %v2437 = vadd.f32 %v2292, %v2436
  %v2438 = vpop.f32.mrf.mxu0
  %v2439 = vpop.f32.mrf.mxu0
  %v2440 = vadd.f32 %v2295, %v2439
  %v2441 = vpop.f32.mrf.mxu0
  %2442 = vmatprep.mubr.bf16.mxu0 0
  %2443 = vmatmul.mubr.bf16.gmra.mxu0 %v2352
  %v2444 = vpop.f32.mrf.mxu0
  %v2445 = vadd.f32 %v2300, %v2444
  %v2446 = vpop.f32.mrf.mxu0
  %v2447 = vpop.f32.mrf.mxu0
  %v2448 = vadd.f32 %v2303, %v2447
  %v2449 = vpop.f32.mrf.mxu0
  %2450 = vdwg.mxu0
  %v2451 = vlaneseq
  %v2452 = vshrl.u32 %v2451, 7
  %v2453 = vsub.s32 5, %v2452
  %v2454 = vrot.slane %v33, %v2453
  %v2455 = vadd.f32 %v2389, %v2454
  %v2456 = vadd.f32 %v2392, %v2454
  %v2457 = vadd.f32 %v2397, %v2454
  %v2458 = vadd.f32 %v2400, %v2454
  %v2459 = vadd.f32 %v2405, %v2454
  %v2460 = vadd.f32 %v2408, %v2454
  %v2461 = vadd.f32 %v2413, %v2454
  %v2462 = vadd.f32 %v2416, %v2454
  %v2463 = vadd.f32 %v2421, %v2454
  %v2464 = vadd.f32 %v2424, %v2454
  %v2465 = vadd.f32 %v2429, %v2454
  %v2466 = vadd.f32 %v2432, %v2454
  %v2467 = vadd.f32 %v2437, %v2454
  %v2468 = vadd.f32 %v2440, %v2454
  %v2469 = vadd.f32 %v2445, %v2454
  %v2470 = vadd.f32 %v2448, %v2454
  %v2471 = vmax.f32 %v2455, 0.0
  %v2472 = vmax.f32 %v2456, 0.0
  %v2473 = vmax.f32 %v2457, 0.0
  %v2474 = vmax.f32 %v2458, 0.0
  %v2475 = vmax.f32 %v2459, 0.0
  %v2476 = vmax.f32 %v2460, 0.0
  %v2477 = vmax.f32 %v2461, 0.0
  %v2478 = vmax.f32 %v2462, 0.0
  %v2479 = vmax.f32 %v2463, 0.0
  %v2480 = vmax.f32 %v2464, 0.0
  %v2481 = vmax.f32 %v2465, 0.0
  %v2482 = vmax.f32 %v2466, 0.0
  %v2483 = vmax.f32 %v2467, 0.0
  %v2484 = vmax.f32 %v2468, 0.0
  %v2485 = vmax.f32 %v2469, 0.0
  %v2486 = vmax.f32 %v2470, 0.0
  %v2487 = vpack.c.bf16 %v2472, %v2471
  %v2488 = vpack.c.bf16 %v2474, %v2473
  %v2489 = vpack.c.bf16 %v2476, %v2475
  %v2490 = vpack.c.bf16 %v2478, %v2477
  %v2491 = vpack.c.bf16 %v2480, %v2479
  %v2492 = vpack.c.bf16 %v2482, %v2481
  %v2493 = vpack.c.bf16 %v2484, %v2483
  %v2494 = vpack.c.bf16 %v2486, %v2485
  %v2495 = vld [vmem:[%s6] sm:$0xf]
  %v2496 = vld [vmem:[%s6 + $0x4] sm:$0xf]
  %v2497 = vld [vmem:[%s6 + $0x8] sm:$0xf]
  %v2498 = vld [vmem:[%s6 + $0xc] sm:$0xf]
  %v2499 = vld [vmem:[%s6 + $0x10] sm:$0xf]
  %v2500 = vld [vmem:[%s6 + $0x14] sm:$0xf]
  %v2501 = vld [vmem:[%s6 + $0x18] sm:$0xf]
  %v2502 = vld [vmem:[%s6 + $0x1c] sm:$0xf]
  %v2503 = vlaneseq
  %v2504 = vshrl.u32 %v2503, 7
  %v2505 = vsub.s32 6, %v2504
  %v2506 = vrot.slane %v33, %v2505
  %v2515 = vunpack.c.l.b16 %v2495
  %v2516 = vunpack.c.l.b16 %v2496
  %v2517 = vunpack.c.l.b16 %v2497
  %v2518 = vunpack.c.l.b16 %v2498
  %v2519 = vunpack.c.l.b16 %v2499
  %v2520 = vunpack.c.l.b16 %v2500
  %v2521 = vunpack.c.l.b16 %v2501
  %v2522 = vunpack.c.l.b16 %v2502
  %v2523 = vpack.c.b16 %v2516, %v2515
  %v2524 = vpack.c.b16 %v2518, %v2517
  %v2525 = vpack.c.b16 %v2520, %v2519
  %v2526 = vpack.c.b16 %v2522, %v2521
  %v2532 = vsel %vm2184, %v2487, 0
  %v2535 = vsel %vm2184, %v2488, 0
  %v2538 = vsel %vm2184, %v2489, 0
  %v2541 = vsel %vm2184, %v2490, 0
  %v2544 = vsel %vm2184, %v2491, 0
  %v2547 = vsel %vm2184, %v2492, 0
  %v2550 = vsel %vm2184, %v2493, 0
  %v2553 = vsel %vm2184, %v2494, 0
  %2555 = vmatprep.subr.bf16.mxu0 0
  %2556 = vmatpush1.bf16.msra.mxu0 0
  %2557 = vmatprep.subr.bf16.mxu0 0
  %2558 = vmatpush1.bf16.msra.mxu0 0
  %2559 = vmatprep.subr.bf16.mxu0 0
  %2560 = vmatpush1.bf16.msra.mxu0 0
  %2561 = vmatprep.subr.bf16.mxu0 0
  %2562 = vmatpush1.bf16.msra.mxu0 0
  %2563 = vmatprep.subr.bf16.mxu0 0
  %2564 = vmatpush1.bf16.msra.mxu0 %v2526
  %2565 = vmatprep.subr.bf16.mxu0 0
  %2566 = vmatpush1.bf16.msra.mxu0 %v2525
  %2567 = vmatprep.subr.bf16.mxu0 0
  %2568 = vmatpush1.bf16.msra.mxu0 %v2524
  %2569 = vmatprep.subr.bf16.mxu0 0
  %2570 = vmatpush1.bf16.msra.mxu0 %v2523
  %2571 = vmatprep.subr.bf16.mxu0 0
  %2572 = vmatpush2.bf16.msra.mxu0 0
  %2573 = vmatprep.subr.bf16.mxu0 0
  %2574 = vmatpush2.bf16.msra.mxu0 0
  %2575 = vmatprep.subr.bf16.mxu0 0
  %2576 = vmatpush2.bf16.msra.mxu0 0
  %2577 = vmatprep.subr.bf16.mxu0 0
  %2578 = vmatpush2.bf16.msra.mxu0 0
  %2579 = vmatprep.subr.bf16.mxu0 0
  %2580 = vmatpush2.bf16.msra.mxu0 0
  %2581 = vmatprep.subr.bf16.mxu0 0
  %2582 = vmatpush2.bf16.msra.mxu0 0
  %2583 = vmatprep.subr.bf16.mxu0 0
  %2584 = vmatpush2.bf16.msra.mxu0 0
  %2585 = vmatprep.subr.bf16.mxu0 0
  %2586 = vmatpush2.bf16.msra.mxu0 0
  %2587 = vmatprep.mubr.bf16.mxu0 0
  %2588 = vmatmul.mubr.bf16.gmra.mxu0 %v2532
  %v2589 = vpop.f32.mrf.mxu0
  %v2590 = vadd.f32 %v2506, %v2589
  %v2591 = vpop.f32.mrf.mxu0
  %v2592 = vpop.f32.mrf.mxu0
  %v2593 = vadd.f32 %v2506, %v2592
  %v2594 = vpop.f32.mrf.mxu0
  %2595 = vmatprep.mubr.bf16.mxu0 0
  %2596 = vmatmul.mubr.bf16.gmra.mxu0 %v2535
  %v2597 = vpop.f32.mrf.mxu0
  %v2598 = vadd.f32 %v2506, %v2597
  %v2599 = vpop.f32.mrf.mxu0
  %v2600 = vpop.f32.mrf.mxu0
  %v2601 = vadd.f32 %v2506, %v2600
  %v2602 = vpop.f32.mrf.mxu0
  %2603 = vmatprep.mubr.bf16.mxu0 0
  %2604 = vmatmul.mubr.bf16.gmra.mxu0 %v2538
  %v2605 = vpop.f32.mrf.mxu0
  %v2606 = vadd.f32 %v2506, %v2605
  %v2607 = vpop.f32.mrf.mxu0
  %v2608 = vpop.f32.mrf.mxu0
  %v2609 = vadd.f32 %v2506, %v2608
  %v2610 = vpop.f32.mrf.mxu0
  %2611 = vmatprep.mubr.bf16.mxu0 0
  %2612 = vmatmul.mubr.bf16.gmra.mxu0 %v2541
  %v2613 = vpop.f32.mrf.mxu0
  %v2614 = vadd.f32 %v2506, %v2613
  %v2615 = vpop.f32.mrf.mxu0
  %v2616 = vpop.f32.mrf.mxu0
  %v2617 = vadd.f32 %v2506, %v2616
  %v2618 = vpop.f32.mrf.mxu0
  %2619 = vmatprep.mubr.bf16.mxu0 0
  %2620 = vmatmul.mubr.bf16.gmra.mxu0 %v2544
  %v2621 = vpop.f32.mrf.mxu0
  %v2622 = vadd.f32 %v2506, %v2621
  %v2623 = vpop.f32.mrf.mxu0
  %v2624 = vpop.f32.mrf.mxu0
  %v2625 = vadd.f32 %v2506, %v2624
  %v2626 = vpop.f32.mrf.mxu0
  %2627 = vmatprep.mubr.bf16.mxu0 0
  %2628 = vmatmul.mubr.bf16.gmra.mxu0 %v2547
  %v2629 = vpop.f32.mrf.mxu0
  %v2630 = vadd.f32 %v2506, %v2629
  %v2631 = vpop.f32.mrf.mxu0
  %v2632 = vpop.f32.mrf.mxu0
  %v2633 = vadd.f32 %v2506, %v2632
  %v2634 = vpop.f32.mrf.mxu0
  %2635 = vmatprep.mubr.bf16.mxu0 0
  %2636 = vmatmul.mubr.bf16.gmra.mxu0 %v2550
  %v2637 = vpop.f32.mrf.mxu0
  %v2638 = vadd.f32 %v2506, %v2637
  %v2639 = vpop.f32.mrf.mxu0
  %v2640 = vpop.f32.mrf.mxu0
  %v2641 = vadd.f32 %v2506, %v2640
  %v2642 = vpop.f32.mrf.mxu0
  %2643 = vmatprep.mubr.bf16.mxu0 0
  %2644 = vmatmul.mubr.bf16.gmra.mxu0 %v2553
  %v2645 = vpop.f32.mrf.mxu0
  %v2646 = vadd.f32 %v2506, %v2645
  %v2647 = vpop.f32.mrf.mxu0
  %v2648 = vpop.f32.mrf.mxu0
  %v2649 = vadd.f32 %v2506, %v2648
  %v2650 = vpop.f32.mrf.mxu0
  %2651 = vdwg.mxu0
  %v2652 = vmax.f32 %v2590, 0.0
  %v2653 = vmax.f32 %v2593, 0.0
  %v2654 = vmax.f32 %v2598, 0.0
  %v2655 = vmax.f32 %v2601, 0.0
  %v2656 = vmax.f32 %v2606, 0.0
  %v2657 = vmax.f32 %v2609, 0.0
  %v2658 = vmax.f32 %v2614, 0.0
  %v2659 = vmax.f32 %v2617, 0.0
  %v2660 = vmax.f32 %v2622, 0.0
  %v2661 = vmax.f32 %v2625, 0.0
  %v2662 = vmax.f32 %v2630, 0.0
  %v2663 = vmax.f32 %v2633, 0.0
  %v2664 = vmax.f32 %v2638, 0.0
  %v2665 = vmax.f32 %v2641, 0.0
  %v2666 = vmax.f32 %v2646, 0.0
  %v2667 = vmax.f32 %v2649, 0.0
  %2668 = vxpose.xlu0.b32.start [1/16] %v2652, 128
  %2669 = vxpose.xlu0.b32.cont [2/16] %v2653, 128
  %2670 = vxpose.xlu0.b32.cont [3/16] %v2654, 128
  %2671 = vxpose.xlu0.b32.cont [4/16] %v2655, 128
  %2672 = vxpose.xlu0.b32.cont [5/16] %v2656, 128
  %2673 = vxpose.xlu0.b32.cont [6/16] %v2657, 128
  %2674 = vxpose.xlu0.b32.cont [7/16] %v2658, 128
  %2675 = vxpose.xlu0.b32.cont [8/16] %v2659, 128
  %2676 = vxpose.xlu0.b32.cont [9/16] %v2660, 128
  %2677 = vxpose.xlu0.b32.cont [10/16] %v2661, 128
  %2678 = vxpose.xlu0.b32.cont [11/16] %v2662, 128
  %2679 = vxpose.xlu0.b32.cont [12/16] %v2663, 128
  %2680 = vxpose.xlu0.b32.cont [13/16] %v2664, 128
  %2681 = vxpose.xlu0.b32.cont [14/16] %v2665, 128
  %2682 = vxpose.xlu0.b32.cont [15/16] %v2666, 128
  %2683 = vxpose.xlu0.b32.end [16/16] %v2667, 128
  %v2684 = vpop.trf.xlu0
  %v2685 = vpop.trf.xlu0
  %v2686 = vpop.trf.xlu0
  %v2687 = vpop.trf.xlu0
  %v2688 = vpop.trf.xlu0
  %v2689 = vpop.trf.xlu0
  %v2690 = vpop.trf.xlu0
  %v2691 = vpop.trf.xlu0
  %v2692 = vpop.trf.xlu0
  %v2693 = vpop.trf.xlu0
  %v2694 = vpop.trf.xlu0
  %v2695 = vpop.trf.xlu0
  %v2696 = vpop.trf.xlu0
  %v2697 = vpop.trf.xlu0
  %v2698 = vpop.trf.xlu0
  %v2699 = vpop.trf.xlu0
  %v2700 = vpack.c.bf16 %v2685, %v2684
  %v2701 = vpack.c.bf16 %v2687, %v2686
  %v2702 = vld [vmem:[%s7] sm:$0x1]
  %2704 = vset.pattern.permute.xlu0 0
  %2705 = vperm.xlu0 %2704, %v33
  %v2706 = vpop.permute.xlu0 %2705
  %v2707 = vrot.slane %v2706, 7
  %v2710 = vsel %vm1230, %v2702, 0
  %2712 = vmatprep.subr.bf16.mxu0 0
  %2713 = vmatpush1.bf16.msra.mxu0 0
  %2714 = vmatprep.subr.bf16.mxu0 0
  %2715 = vmatpush1.bf16.msra.mxu0 0
  %2716 = vmatprep.subr.bf16.mxu0 0
  %2717 = vmatpush1.bf16.msra.mxu0 0
  %2718 = vmatprep.subr.bf16.mxu0 0
  %2719 = vmatpush1.bf16.msra.mxu0 0
  %2720 = vmatprep.subr.bf16.mxu0 0
  %2721 = vmatpush1.bf16.msra.mxu0 0
  %2722 = vmatprep.subr.bf16.mxu0 0
  %2723 = vmatpush1.bf16.msra.mxu0 0
  %2724 = vmatprep.subr.bf16.mxu0 0
  %2725 = vmatpush1.bf16.msra.mxu0 %v2701
  %2726 = vmatprep.subr.bf16.mxu0 0
  %2727 = vmatpush1.bf16.msra.mxu0 %v2700
  %2728 = vmatprep.subr.bf16.mxu0 0
  %2729 = vmatpush2.bf16.msra.mxu0 0
  %2730 = vmatprep.subr.bf16.mxu0 0
  %2731 = vmatpush2.bf16.msra.mxu0 0
  %2732 = vmatprep.subr.bf16.mxu0 0
  %2733 = vmatpush2.bf16.msra.mxu0 0
  %2734 = vmatprep.subr.bf16.mxu0 0
  %2735 = vmatpush2.bf16.msra.mxu0 0
  %2736 = vmatprep.subr.bf16.mxu0 0
  %2737 = vmatpush2.bf16.msra.mxu0 0
  %2738 = vmatprep.subr.bf16.mxu0 0
  %2739 = vmatpush2.bf16.msra.mxu0 0
  %2740 = vmatprep.subr.bf16.mxu0 0
  %2741 = vmatpush2.bf16.msra.mxu0 0
  %2742 = vmatprep.subr.bf16.mxu0 0
  %2743 = vmatpush2.bf16.msra.mxu0 0
  %2744 = vmatprep.mubr.bf16.mxu0 0
  %2745 = vmatmul.mubr.bf16.gmra.mxu0 %v2710
  %v2746 = vpop.f32.mrf.mxu0
  %v2747 = vadd.f32 %v2707, %v2746
  %v2748 = vpop.f32.mrf.mxu0
  %v2749 = vpop.f32.mrf.mxu0
  %v2750 = vpop.f32.mrf.mxu0
  %2751 = vdwg.mxu0
  %2752 = vst [vmem:[%s9] sm:$0x1] %v2747
  // Predicated region
  $region38: #{astmad_forward.1} parent=0 // pred_check
    _
  $region39: #{astmad_forward.1} parent=0 // pred_check_branch
    %2754 = sbr.rel (0) target = $region41
  $region40: #{astmad_forward.1} parent=0 // pred_region
    _
  $region41: #{astmad_forward.1} parent=0 // pred_fallthru
    _
  // Predicated region
  $region42: #{astmad_forward.1} parent=0 // pred_check
    _
  $region43: #{astmad_forward.1} parent=0 // pred_check_branch
    %2756 = sbr.rel (0) target = $region45
  $region44: #{astmad_forward.1} parent=0 // pred_region
    _
  $region45: #{astmad_forward.1} parent=0 // pred_fallthru
    _

</llo_original>
